<compile_context>
chip_gen: v5e
topology: v5e:2x2
jax: 0.10.0
libtpu: 0.0.40
codegen_flags: <defaults>
</compile_context>

<pallas_src>
import functools

import jax
import jax.numpy as jnp
from jax.experimental import pallas as pl
from jax.experimental.pallas import tpu as pltpu

_LANE = 128     # vreg lane count (last-dim tile)
_SUBLANE = 8    # vreg sublane count for f32 (second-to-last-dim tile)


def _round_up(x, m):
    return (x + m - 1) // m * m


def _vmem_capacity_bytes():
    """Physical VMEM of the current TPU generation (conservative fallback)."""
    try:
        cap = getattr(pltpu.get_tpu_info(), "vmem_capacity_bytes", None)
        if cap:
            return int(cap)
    except Exception:
        pass
    return 64 * 1024 * 1024   # v7x per-TensorCore VMEM — safe lower bound


def _lstm_recurrence_kernel(xp_ref, whh_hbm, out_ref,
                            whh_sc, h_sc, c_sc, w_sem,
                            *, t_blk, seq_len, zp, needs_mask, unroll):
    """One grid step = `t_blk` timesteps of the recurrence for one batch shard.

    Grid: (batch shards [parallel], time chunks [arbitrary, serial]).

    xp_ref : (t_blk, b_blk, 4*zp) precomputed x_t @ W_ih^T + bias
                                  (gate order i, f, o, g; streamed compute_dtype)
    whh_hbm: (zp, 4*zp)           W_hh^T, raw HBM ref (memory_space=pl.ANY)
    out_ref: (b_blk, zp)          final hidden state (written once, last chunk)
    whh_sc : (zp, 4*zp)           single-buffered VMEM copy of W_hh^T
    h_sc,c_sc: (b_blk, zp) f32    recurrent state, persists across chunks
    w_sem  : DMA semaphore for the one-shot weight copy
    """
    chunk = pl.program_id(1)
    last_chunk = pl.num_programs(1) - 1

    @pl.when(chunk == 0)
    def _init():
        # Single-buffered weight load: the block is constant across the grid,
        # so a one-shot DMA into scratch replaces per-chunk double-buffered
        # BlockSpec DMAs (reclaims 2x|W_hh| VMEM).  Re-issued once per batch
        # shard because scratch is per-core under megacore sharding; that is
        # one DMA per shard, negligible vs. the T-step serial recurrence.
        cp = pltpu.make_async_copy(whh_hbm, whh_sc, w_sem)
        cp.start()
        h_sc[...] = jnp.zeros_like(h_sc)
        c_sc[...] = jnp.zeros_like(c_sc)
        cp.wait()

    whh = whh_sc[...]          # hoisted out of the loop; matmul dtype
    zp3 = 3 * zp
    base = chunk * t_blk       # first global timestep of this chunk

    def step(i, carry):
        h, c = carry
        # bf16 operands feed the MXU, accumulation in f32; gates / h / c stay
        # f32 (v5e has no bf16 VPU/EUP, and accuracy impact is negligible).
        pre = xp_ref[i].astype(jnp.float32) + jnp.dot(
            h.astype(whh.dtype), whh, preferred_element_type=jnp.float32)
        # zp is a multiple of 128, so every slice below is lane-tile aligned:
        # one sigmoid over [0, 3*zp) + one tanh over [3*zp, 4*zp) — no
        # whole-vreg where(sigmoid, tanh) double EUP work on the serial path.
        sig = jax.nn.sigmoid(pre[:, :zp3])
        g_g = jnp.tanh(pre[:, zp3:])
        i_g = sig[:, :zp]
        f_g = sig[:, zp:2 * zp]
        o_g = sig[:, 2 * zp:zp3]
        c_new = f_g * c + i_g * g_g
        h_new = o_g * jnp.tanh(c_new)
        if needs_mask:
            # Ragged last chunk: static trip count + predicated carry keeps
            # the loop unrollable; out-of-range timesteps are computed on
            # whatever the partial block holds but then dropped.
            valid = (base + i) < seq_len
            h_new = jnp.where(valid, h_new, h)
            c_new = jnp.where(valid, c_new, c)
        return h_new, c_new

    h_new, c_new = jax.lax.fori_loop(
        0, t_blk, step, (h_sc[...], c_sc[...]), unroll=unroll)

    # State only touches VMEM scratch at chunk boundaries.
    h_sc[...] = h_new
    c_sc[...] = c_new

    @pl.when(chunk == last_chunk)
    def _write():
        out_ref[...] = h_new.astype(out_ref.dtype)


@functools.partial(jax.jit, static_argnames=("compute_dtype",))
def lstm_embed_forward(x_idx, emb_table, w_ih, w_hh, b_ih, b_hh,
                       *, compute_dtype=jnp.bfloat16):
    """Pallas implementation of LSTM_embed.forward.

    x_idx:     [B, T] int32 token indices
    emb_table: [vocab+1, H]
    w_ih:      [4Z, H]   (PyTorch weight_ih_l0, gate order i,f,g,o)
    w_hh:      [4Z, Z]   (PyTorch weight_hh_l0)
    b_ih,b_hh: [4Z]
    compute_dtype: dtype of the streamed x_proj and MXU operands (bf16 default;
                   gate math / state / accumulation are always f32).
    returns:   [B, Z] float32 (last-timestep hidden state)
    """
    B, T = x_idx.shape
    H = emb_table.shape[1]
    Z = w_hh.shape[1]

    # --- Layout padding (exact: padded gate lanes / batch rows stay inert) ---
    Zp = _round_up(Z, _LANE)      # lane-aligned gate width
    Bp = _round_up(B, _SUBLANE)   # sublane-aligned batch
    if Bp > _LANE:
        b_blk = _LANE             # per-shard batch tile: keeps MXU rows busy
        Bp = _round_up(Bp, b_blk)
    else:
        b_blk = Bp
    num_b = Bp // b_blk

    # --- Gate permutation (i,f,g,o) -> (i,f,o,g) + Z->Zp zero padding --------
    # Padded gate columns get pre-activation exactly 0, so padded c/h lanes
    # stay exactly 0 from the zero init: padding does not perturb results.
    perm = jnp.array([0, 1, 3, 2])
    pad_z = Zp - Z
    w_ih_p = jnp.pad(w_ih.reshape(4, Z, H)[perm],
                     ((0, 0), (0, pad_z), (0, 0))).reshape(4 * Zp, H)
    w_hh_p = jnp.pad(w_hh.reshape(4, Z, Z)[perm],
                     ((0, 0), (0, pad_z), (0, pad_z))).reshape(4 * Zp, Zp)
    bias_p = jnp.pad((b_ih + b_hh).reshape(4, Z)[perm],
                     ((0, 0), (0, pad_z))).reshape(4 * Zp)

    wih_t = jnp.transpose(w_ih_p).astype(jnp.float32)     # [H, 4Zp]
    whh_t = jnp.transpose(w_hh_p).astype(compute_dtype)   # [Zp, 4Zp] MXU operand

    # --- Hoisted, MXU-friendly input projection (off the serial path) --------
    # NOTE: jnp.take clamps out-of-range indices (PyTorch Embedding raises);
    # results are identical for valid inputs.
    x_tm = jnp.take(emb_table, x_idx.T, axis=0).astype(jnp.float32)   # [T, B, H]
    x_proj = (x_tm.reshape(T * B, H) @ wih_t + bias_p).reshape(T, B, 4 * Zp)
    if Bp != B:
        x_proj = jnp.pad(x_proj, ((0, 0), (0, Bp - B), (0, 0)))
    # x_proj is the only O(T) HBM stream; storing/streaming it in compute_dtype
    # (bf16) halves the memory-bound roofline.  The kernel upcasts to f32.
    x_proj = x_proj.astype(compute_dtype)

    # --- Time chunking from a per-generation VMEM budget ---------------------
    itemsize = jnp.dtype(compute_dtype).itemsize
    vmem_cap = _vmem_capacity_bytes()
    budget = max(min(vmem_cap // 2, 96 * 1024 * 1024), 32 * 1024 * 1024)
    weight_bytes = Zp * 4 * Zp * itemsize            # single-buffered W_hh^T
    state_bytes = 2 * b_blk * Zp * 4                 # h, c scratch (f32)
    out_bytes = 2 * b_blk * Zp * 4                   # output block (double-buffered)
    headroom = 2 * 1024 * 1024                       # compiler scratch slack
    per_step_bytes = b_blk * 4 * Zp * itemsize       # one timestep of x_proj
    avail = budget - weight_bytes - state_bytes - out_bytes - headroom
    t_blk = int(max(1, min(T, avail // (2 * per_step_bytes))))  # x_proj double-buffered
    num_chunks = pl.cdiv(T, t_blk)
    needs_mask = (T % t_blk) != 0

    kernel = functools.partial(
        _lstm_recurrence_kernel,
        t_blk=t_blk, seq_len=T, zp=Zp, needs_mask=needs_mask,
        unroll=True if t_blk <= 16 else 8,
    )

    grid_spec = pltpu.PrefetchScalarGridSpec(
        num_scalar_prefetch=0,
        grid=(num_b, num_chunks),
        in_specs=[
            pl.BlockSpec((t_blk, b_blk, 4 * Zp), lambda b, c: (c, b, 0)),
            pl.BlockSpec(memory_space=pl.ANY),       # W_hh^T: one-shot DMA in-kernel
        ],
        out_specs=pl.BlockSpec((b_blk, Zp), lambda b, c: (b, 0)),
        scratch_shapes=[
            pltpu.VMEM((Zp, 4 * Zp), compute_dtype),   # single-buffered weights
            pltpu.VMEM((b_blk, Zp), jnp.float32),      # h
            pltpu.VMEM((b_blk, Zp), jnp.float32),      # c
            pltpu.SemaphoreType.DMA(()),               # weight-copy semaphore
        ],
    )

    out = pl.pallas_call(
        kernel,
        out_shape=jax.ShapeDtypeStruct((Bp, Zp), jnp.float32),
        grid_spec=grid_spec,
        compiler_params=pltpu.CompilerParams(
            # Batch shards are independent (megacore / v7x second TensorCore);
            # the time recurrence is inherently serial.
            dimension_semantics=("parallel", "arbitrary"),
            vmem_limit_bytes=int(budget),
        ),
    )(x_proj, whh_t)

    return out[:B, :Z]


def _reference_forward(x_idx, emb_table, w_ih, w_hh, b_ih, b_hh):
    """Pure-JAX reference matching torch.nn.LSTM semantics (gate order i,f,g,o)."""
    B, T = x_idx.shape
    Z = w_hh.shape[1]
    x_emb = jnp.take(emb_table, x_idx, axis=0)  # [B, T, H]

    def step(carry, x_t):
        h, c = carry
        pre = x_t @ w_ih.T + b_ih + h @ w_hh.T + b_hh
        i = jax.nn.sigmoid(pre[:, 0 * Z:1 * Z])
        f = jax.nn.sigmoid(pre[:, 1 * Z:2 * Z])
        g = jnp.tanh(pre[:, 2 * Z:3 * Z])
        o = jax.nn.sigmoid(pre[:, 3 * Z:4 * Z])
        c = f * c + i * g
        h = o * jnp.tanh(c)
        return (h, c), None

    h0 = jnp.zeros((B, Z), jnp.float32)
    c0 = jnp.zeros((B, Z), jnp.float32)
    (h_last, _), _ = jax.lax.scan(step, (h0, c0),
                                  jnp.transpose(x_emb, (1, 0, 2)))
    return h_last


if __name__ == "__main__":
    # Small shapes consistent with the module.
    B, T = 2, 8
    hidden_dim = 32   # embedding dim / LSTM input size
    z_dim = 32        # LSTM hidden size
    vocab_size = 16

    key = jax.random.PRNGKey(0)
    k_idx, k_emb, k_wih, k_whh, k_bih, k_bhh = jax.random.split(key, 6)

    x_idx = jax.random.randint(k_idx, (B, T), 0, vocab_size + 1, dtype=jnp.int32)

    emb_table = jax.random.normal(k_emb, (vocab_size + 1, hidden_dim), jnp.float32)
    bound = 1.0 / float(z_dim) ** 0.5
    w_ih = jax.random.uniform(k_wih, (4 * z_dim, hidden_dim), jnp.float32,
                              -bound, bound)
    w_hh = jax.random.uniform(k_whh, (4 * z_dim, z_dim), jnp.float32,
                              -bound, bound)
    b_ih = jax.random.uniform(k_bih, (4 * z_dim,), jnp.float32, -bound, bound)
    b_hh = jax.random.uniform(k_bhh, (4 * z_dim,), jnp.float32, -bound, bound)

    ref = _reference_forward(x_idx, emb_table, w_ih, w_hh, b_ih, b_hh)

    # Default (bf16-streamed) path: the production configuration.
    out_bf16 = lstm_embed_forward(x_idx, emb_table, w_ih, w_hh, b_ih, b_hh)
    out_bf16 = jax.block_until_ready(out_bf16)
    assert out_bf16.shape == (B, z_dim)
    assert jnp.allclose(out_bf16, ref, atol=5e-2, rtol=5e-2), \
        "bf16 kernel mismatch vs reference"

    # f32 path: tight structural/numerical check against the pure-JAX reference.
    out_f32 = lstm_embed_forward(x_idx, emb_table, w_ih, w_hh, b_ih, b_hh,
                                 compute_dtype=jnp.float32)
    out_f32 = jax.block_until_ready(out_f32)
    assert out_f32.shape == (B, z_dim)
    assert jnp.allclose(out_f32, ref, atol=1e-5, rtol=1e-5), \
        "f32 kernel mismatch vs reference"

    print("KERNEL_OK")
</pallas_src>

<mosaic_0001>
module attributes {stable_mosaic.version = 11 : i64} {
  func.func @_lstm_recurrence_kernel(%arg0: i32, %arg1: i32, %arg2: memref<8x8x512xbf16, #tpu.memory_space<vmem>>, %arg3: memref<128x512xbf16, #tpu.memory_space<any>>, %arg4: memref<8x128xf32, #tpu.memory_space<vmem>>, %arg5: memref<128x512xbf16, #tpu.memory_space<vmem>>, %arg6: memref<8x128xf32, #tpu.memory_space<vmem>>, %arg7: memref<8x128xf32, #tpu.memory_space<vmem>>, %arg8: memref<!tpu.dma_semaphore, #tpu.memory_space<semaphore_mem>>) attributes {dimension_semantics = [#tpu.dimension_semantics<parallel>, #tpu.dimension_semantics<arbitrary>], iteration_bounds = array<i64: 1, 1>, scalar_prefetch = 0 : i64, scratch_operands = 4 : i64, tpu.core_type = #tpu.core_type<tc>, window_params = [{transform_indices = @transform_0, window_bounds = array<i64: 8, 8, 512>}, {}, {transform_indices = @transform_2, window_bounds = array<i64: 8, 128>}]} {
    %c0_i32 = arith.constant 0 : i32
    %0 = arith.cmpi eq, %arg1, %c0_i32 : i32
    %1 = arith.extui %0 : i1 to i32
    %c0_i32_0 = arith.constant 0 : i32
    %2 = arith.cmpi ne, %1, %c0_i32_0 : i32
    scf.if %2 {
      tpu.enqueue_dma source(%arg3 : memref<128x512xbf16, #tpu.memory_space<any>>) target(%arg5 : memref<128x512xbf16, #tpu.memory_space<vmem>>) target_semaphore(%arg8 : memref<!tpu.dma_semaphore, #tpu.memory_space<semaphore_mem>>)
      %cst_44 = arith.constant 0.000000e+00 : f32
      %195 = vector.broadcast %cst_44 : f32 to vector<8x128xf32>
      %c0_45 = arith.constant 0 : index
      %c0_46 = arith.constant 0 : index
      %196 = vector.load %arg6[%c0_45, %c0_46] : memref<8x128xf32, #tpu.memory_space<vmem>>, vector<8x128xf32>
      tpu.vector_store %arg6[%c0_45, %c0_46], %195 {strides = array<i32>} : memref<8x128xf32, #tpu.memory_space<vmem>>, vector<8x128xf32>,
      %cst_47 = arith.constant 0.000000e+00 : f32
      %197 = vector.broadcast %cst_47 : f32 to vector<8x128xf32>
      %c0_48 = arith.constant 0 : index
      %c0_49 = arith.constant 0 : index
      %198 = vector.load %arg7[%c0_48, %c0_49] : memref<8x128xf32, #tpu.memory_space<vmem>>, vector<8x128xf32>
      tpu.vector_store %arg7[%c0_48, %c0_49], %197 {strides = array<i32>} : memref<8x128xf32, #tpu.memory_space<vmem>>, vector<8x128xf32>,
      tpu.wait_dma2 semaphore(%arg8 : memref<!tpu.dma_semaphore, #tpu.memory_space<semaphore_mem>>) src(%arg3 : memref<128x512xbf16, #tpu.memory_space<any>>) dst(%arg5 : memref<128x512xbf16, #tpu.memory_space<vmem>>)
    } else {
    }
    %c0 = arith.constant 0 : index
    %c0_1 = arith.constant 0 : index
    %3 = vector.load %arg5[%c0, %c0_1] : memref<128x512xbf16, #tpu.memory_space<vmem>>, vector<128x512xbf16>
    %c0_2 = arith.constant 0 : index
    %c0_3 = arith.constant 0 : index
    %4 = vector.load %arg6[%c0_2, %c0_3] : memref<8x128xf32, #tpu.memory_space<vmem>>, vector<8x128xf32>
    %c0_4 = arith.constant 0 : index
    %c0_5 = arith.constant 0 : index
    %5 = vector.load %arg7[%c0_4, %c0_5] : memref<8x128xf32, #tpu.memory_space<vmem>>, vector<8x128xf32>
    %c0_i32_6 = arith.constant 0 : i32
    %6 = arith.index_cast %c0_i32_6 : i32 to index
    %c0_7 = arith.constant 0 : index
    %c0_8 = arith.constant 0 : index
    %7 = vector.load %arg2[%6, %c0_7, %c0_8] : memref<8x8x512xbf16, #tpu.memory_space<vmem>>, vector<1x8x512xbf16>
    %8 = vector.shape_cast %7 : vector<1x8x512xbf16> to vector<8x512xbf16>
    %9 = arith.extf %8 : vector<8x512xbf16> to vector<8x512xf32>
    %10 = arith.truncf %4 : vector<8x128xf32> to vector<8x128xbf16>
    %cst = arith.constant dense<0.000000e+00> : vector<8x512xf32>
    %11 = tpu.matmul %10, %3, %cst {dimension_numbers = #tpu.dot_dimension_numbers<[1], [0], [0], [1], [0, 0, 1, 1], [], []>} : vector<8x128xbf16>, vector<128x512xbf16>, vector<8x512xf32> -> vector<8x512xf32>
    %12 = arith.addf %9, %11 : vector<8x512xf32>
    %13 = vector.extract_strided_slice %12 {offsets = [0, 0], sizes = [8, 384], strides = [1, 1]} : vector<8x512xf32> to vector<8x384xf32>
    %14 = arith.negf %13 : vector<8x384xf32>
    %15 = math.exp %14 : vector<8x384xf32>
    %cst_9 = arith.constant 1.000000e+00 : f32
    %16 = vector.broadcast %cst_9 : f32 to vector<8x384xf32>
    %17 = arith.addf %16, %15 : vector<8x384xf32>
    %18 = arith.divf %16, %17 : vector<8x384xf32>
    %19 = vector.extract_strided_slice %12 {offsets = [0, 384], sizes = [8, 128], strides = [1, 1]} : vector<8x512xf32> to vector<8x128xf32>
    %20 = math.tanh %19 : vector<8x128xf32>
    %21 = vector.extract_strided_slice %18 {offsets = [0, 0], sizes = [8, 128], strides = [1, 1]} : vector<8x384xf32> to vector<8x128xf32>
    %22 = vector.extract_strided_slice %18 {offsets = [0, 128], sizes = [8, 128], strides = [1, 1]} : vector<8x384xf32> to vector<8x128xf32>
    %23 = vector.extract_strided_slice %18 {offsets = [0, 256], sizes = [8, 128], strides = [1, 1]} : vector<8x384xf32> to vector<8x128xf32>
    %24 = arith.mulf %22, %5 : vector<8x128xf32>
    %25 = arith.mulf %21, %20 : vector<8x128xf32>
    %26 = arith.addf %24, %25 : vector<8x128xf32>
    %27 = math.tanh %26 : vector<8x128xf32>
    %28 = arith.mulf %23, %27 : vector<8x128xf32>
    %c1_i32 = arith.constant 1 : i32
    %29 = arith.index_cast %c1_i32 : i32 to index
    %c0_10 = arith.constant 0 : index
    %c0_11 = arith.constant 0 : index
    %30 = vector.load %arg2[%29, %c0_10, %c0_11] : memref<8x8x512xbf16, #tpu.memory_space<vmem>>, vector<1x8x512xbf16>
    %31 = vector.shape_cast %30 : vector<1x8x512xbf16> to vector<8x512xbf16>
    %32 = arith.extf %31 : vector<8x512xbf16> to vector<8x512xf32>
    %33 = arith.truncf %28 : vector<8x128xf32> to vector<8x128xbf16>
    %cst_12 = arith.constant dense<0.000000e+00> : vector<8x512xf32>
    %34 = tpu.matmul %33, %3, %cst_12 {dimension_numbers = #tpu.dot_dimension_numbers<[1], [0], [0], [1], [0, 0, 1, 1], [], []>} : vector<8x128xbf16>, vector<128x512xbf16>, vector<8x512xf32> -> vector<8x512xf32>
    %35 = arith.addf %32, %34 : vector<8x512xf32>
    %36 = vector.extract_strided_slice %35 {offsets = [0, 0], sizes = [8, 384], strides = [1, 1]} : vector<8x512xf32> to vector<8x384xf32>
    %37 = arith.negf %36 : vector<8x384xf32>
    %38 = math.exp %37 : vector<8x384xf32>
    %cst_13 = arith.constant 1.000000e+00 : f32
    %39 = vector.broadcast %cst_13 : f32 to vector<8x384xf32>
    %40 = arith.addf %39, %38 : vector<8x384xf32>
    %41 = arith.divf %39, %40 : vector<8x384xf32>
    %42 = vector.extract_strided_slice %35 {offsets = [0, 384], sizes = [8, 128], strides = [1, 1]} : vector<8x512xf32> to vector<8x128xf32>
    %43 = math.tanh %42 : vector<8x128xf32>
    %44 = vector.extract_strided_slice %41 {offsets = [0, 0], sizes = [8, 128], strides = [1, 1]} : vector<8x384xf32> to vector<8x128xf32>
    %45 = vector.extract_strided_slice %41 {offsets = [0, 128], sizes = [8, 128], strides = [1, 1]} : vector<8x384xf32> to vector<8x128xf32>
    %46 = vector.extract_strided_slice %41 {offsets = [0, 256], sizes = [8, 128], strides = [1, 1]} : vector<8x384xf32> to vector<8x128xf32>
    %47 = arith.mulf %45, %26 : vector<8x128xf32>
    %48 = arith.mulf %44, %43 : vector<8x128xf32>
    %49 = arith.addf %47, %48 : vector<8x128xf32>
    %50 = math.tanh %49 : vector<8x128xf32>
    %51 = arith.mulf %46, %50 : vector<8x128xf32>
    %c2_i32 = arith.constant 2 : i32
    %52 = arith.index_cast %c2_i32 : i32 to index
    %c0_14 = arith.constant 0 : index
    %c0_15 = arith.constant 0 : index
    %53 = vector.load %arg2[%52, %c0_14, %c0_15] : memref<8x8x512xbf16, #tpu.memory_space<vmem>>, vector<1x8x512xbf16>
    %54 = vector.shape_cast %53 : vector<1x8x512xbf16> to vector<8x512xbf16>
    %55 = arith.extf %54 : vector<8x512xbf16> to vector<8x512xf32>
    %56 = arith.truncf %51 : vector<8x128xf32> to vector<8x128xbf16>
    %cst_16 = arith.constant dense<0.000000e+00> : vector<8x512xf32>
    %57 = tpu.matmul %56, %3, %cst_16 {dimension_numbers = #tpu.dot_dimension_numbers<[1], [0], [0], [1], [0, 0, 1, 1], [], []>} : vector<8x128xbf16>, vector<128x512xbf16>, vector<8x512xf32> -> vector<8x512xf32>
    %58 = arith.addf %55, %57 : vector<8x512xf32>
    %59 = vector.extract_strided_slice %58 {offsets = [0, 0], sizes = [8, 384], strides = [1, 1]} : vector<8x512xf32> to vector<8x384xf32>
    %60 = arith.negf %59 : vector<8x384xf32>
    %61 = math.exp %60 : vector<8x384xf32>
    %cst_17 = arith.constant 1.000000e+00 : f32
    %62 = vector.broadcast %cst_17 : f32 to vector<8x384xf32>
    %63 = arith.addf %62, %61 : vector<8x384xf32>
    %64 = arith.divf %62, %63 : vector<8x384xf32>
    %65 = vector.extract_strided_slice %58 {offsets = [0, 384], sizes = [8, 128], strides = [1, 1]} : vector<8x512xf32> to vector<8x128xf32>
    %66 = math.tanh %65 : vector<8x128xf32>
    %67 = vector.extract_strided_slice %64 {offsets = [0, 0], sizes = [8, 128], strides = [1, 1]} : vector<8x384xf32> to vector<8x128xf32>
    %68 = vector.extract_strided_slice %64 {offsets = [0, 128], sizes = [8, 128], strides = [1, 1]} : vector<8x384xf32> to vector<8x128xf32>
    %69 = vector.extract_strided_slice %64 {offsets = [0, 256], sizes = [8, 128], strides = [1, 1]} : vector<8x384xf32> to vector<8x128xf32>
    %70 = arith.mulf %68, %49 : vector<8x128xf32>
    %71 = arith.mulf %67, %66 : vector<8x128xf32>
    %72 = arith.addf %70, %71 : vector<8x128xf32>
    %73 = math.tanh %72 : vector<8x128xf32>
    %74 = arith.mulf %69, %73 : vector<8x128xf32>
    %c3_i32 = arith.constant 3 : i32
    %75 = arith.index_cast %c3_i32 : i32 to index
    %c0_18 = arith.constant 0 : index
    %c0_19 = arith.constant 0 : index
    %76 = vector.load %arg2[%75, %c0_18, %c0_19] : memref<8x8x512xbf16, #tpu.memory_space<vmem>>, vector<1x8x512xbf16>
    %77 = vector.shape_cast %76 : vector<1x8x512xbf16> to vector<8x512xbf16>
    %78 = arith.extf %77 : vector<8x512xbf16> to vector<8x512xf32>
    %79 = arith.truncf %74 : vector<8x128xf32> to vector<8x128xbf16>
    %cst_20 = arith.constant dense<0.000000e+00> : vector<8x512xf32>
    %80 = tpu.matmul %79, %3, %cst_20 {dimension_numbers = #tpu.dot_dimension_numbers<[1], [0], [0], [1], [0, 0, 1, 1], [], []>} : vector<8x128xbf16>, vector<128x512xbf16>, vector<8x512xf32> -> vector<8x512xf32>
    %81 = arith.addf %78, %80 : vector<8x512xf32>
    %82 = vector.extract_strided_slice %81 {offsets = [0, 0], sizes = [8, 384], strides = [1, 1]} : vector<8x512xf32> to vector<8x384xf32>
    %83 = arith.negf %82 : vector<8x384xf32>
    %84 = math.exp %83 : vector<8x384xf32>
    %cst_21 = arith.constant 1.000000e+00 : f32
    %85 = vector.broadcast %cst_21 : f32 to vector<8x384xf32>
    %86 = arith.addf %85, %84 : vector<8x384xf32>
    %87 = arith.divf %85, %86 : vector<8x384xf32>
    %88 = vector.extract_strided_slice %81 {offsets = [0, 384], sizes = [8, 128], strides = [1, 1]} : vector<8x512xf32> to vector<8x128xf32>
    %89 = math.tanh %88 : vector<8x128xf32>
    %90 = vector.extract_strided_slice %87 {offsets = [0, 0], sizes = [8, 128], strides = [1, 1]} : vector<8x384xf32> to vector<8x128xf32>
    %91 = vector.extract_strided_slice %87 {offsets = [0, 128], sizes = [8, 128], strides = [1, 1]} : vector<8x384xf32> to vector<8x128xf32>
    %92 = vector.extract_strided_slice %87 {offsets = [0, 256], sizes = [8, 128], strides = [1, 1]} : vector<8x384xf32> to vector<8x128xf32>
    %93 = arith.mulf %91, %72 : vector<8x128xf32>
    %94 = arith.mulf %90, %89 : vector<8x128xf32>
    %95 = arith.addf %93, %94 : vector<8x128xf32>
    %96 = math.tanh %95 : vector<8x128xf32>
    %97 = arith.mulf %92, %96 : vector<8x128xf32>
    %c4_i32 = arith.constant 4 : i32
    %98 = arith.index_cast %c4_i32 : i32 to index
    %c0_22 = arith.constant 0 : index
    %c0_23 = arith.constant 0 : index
    %99 = vector.load %arg2[%98, %c0_22, %c0_23] : memref<8x8x512xbf16, #tpu.memory_space<vmem>>, vector<1x8x512xbf16>
    %100 = vector.shape_cast %99 : vector<1x8x512xbf16> to vector<8x512xbf16>
    %101 = arith.extf %100 : vector<8x512xbf16> to vector<8x512xf32>
    %102 = arith.truncf %97 : vector<8x128xf32> to vector<8x128xbf16>
    %cst_24 = arith.constant dense<0.000000e+00> : vector<8x512xf32>
    %103 = tpu.matmul %102, %3, %cst_24 {dimension_numbers = #tpu.dot_dimension_numbers<[1], [0], [0], [1], [0, 0, 1, 1], [], []>} : vector<8x128xbf16>, vector<128x512xbf16>, vector<8x512xf32> -> vector<8x512xf32>
    %104 = arith.addf %101, %103 : vector<8x512xf32>
    %105 = vector.extract_strided_slice %104 {offsets = [0, 0], sizes = [8, 384], strides = [1, 1]} : vector<8x512xf32> to vector<8x384xf32>
    %106 = arith.negf %105 : vector<8x384xf32>
    %107 = math.exp %106 : vector<8x384xf32>
    %cst_25 = arith.constant 1.000000e+00 : f32
    %108 = vector.broadcast %cst_25 : f32 to vector<8x384xf32>
    %109 = arith.addf %108, %107 : vector<8x384xf32>
    %110 = arith.divf %108, %109 : vector<8x384xf32>
    %111 = vector.extract_strided_slice %104 {offsets = [0, 384], sizes = [8, 128], strides = [1, 1]} : vector<8x512xf32> to vector<8x128xf32>
    %112 = math.tanh %111 : vector<8x128xf32>
    %113 = vector.extract_strided_slice %110 {offsets = [0, 0], sizes = [8, 128], strides = [1, 1]} : vector<8x384xf32> to vector<8x128xf32>
    %114 = vector.extract_strided_slice %110 {offsets = [0, 128], sizes = [8, 128], strides = [1, 1]} : vector<8x384xf32> to vector<8x128xf32>
    %115 = vector.extract_strided_slice %110 {offsets = [0, 256], sizes = [8, 128], strides = [1, 1]} : vector<8x384xf32> to vector<8x128xf32>
    %116 = arith.mulf %114, %95 : vector<8x128xf32>
    %117 = arith.mulf %113, %112 : vector<8x128xf32>
    %118 = arith.addf %116, %117 : vector<8x128xf32>
    %119 = math.tanh %118 : vector<8x128xf32>
    %120 = arith.mulf %115, %119 : vector<8x128xf32>
    %c5_i32 = arith.constant 5 : i32
    %121 = arith.index_cast %c5_i32 : i32 to index
    %c0_26 = arith.constant 0 : index
    %c0_27 = arith.constant 0 : index
    %122 = vector.load %arg2[%121, %c0_26, %c0_27] : memref<8x8x512xbf16, #tpu.memory_space<vmem>>, vector<1x8x512xbf16>
    %123 = vector.shape_cast %122 : vector<1x8x512xbf16> to vector<8x512xbf16>
    %124 = arith.extf %123 : vector<8x512xbf16> to vector<8x512xf32>
    %125 = arith.truncf %120 : vector<8x128xf32> to vector<8x128xbf16>
    %cst_28 = arith.constant dense<0.000000e+00> : vector<8x512xf32>
    %126 = tpu.matmul %125, %3, %cst_28 {dimension_numbers = #tpu.dot_dimension_numbers<[1], [0], [0], [1], [0, 0, 1, 1], [], []>} : vector<8x128xbf16>, vector<128x512xbf16>, vector<8x512xf32> -> vector<8x512xf32>
    %127 = arith.addf %124, %126 : vector<8x512xf32>
    %128 = vector.extract_strided_slice %127 {offsets = [0, 0], sizes = [8, 384], strides = [1, 1]} : vector<8x512xf32> to vector<8x384xf32>
    %129 = arith.negf %128 : vector<8x384xf32>
    %130 = math.exp %129 : vector<8x384xf32>
    %cst_29 = arith.constant 1.000000e+00 : f32
    %131 = vector.broadcast %cst_29 : f32 to vector<8x384xf32>
    %132 = arith.addf %131, %130 : vector<8x384xf32>
    %133 = arith.divf %131, %132 : vector<8x384xf32>
    %134 = vector.extract_strided_slice %127 {offsets = [0, 384], sizes = [8, 128], strides = [1, 1]} : vector<8x512xf32> to vector<8x128xf32>
    %135 = math.tanh %134 : vector<8x128xf32>
    %136 = vector.extract_strided_slice %133 {offsets = [0, 0], sizes = [8, 128], strides = [1, 1]} : vector<8x384xf32> to vector<8x128xf32>
    %137 = vector.extract_strided_slice %133 {offsets = [0, 128], sizes = [8, 128], strides = [1, 1]} : vector<8x384xf32> to vector<8x128xf32>
    %138 = vector.extract_strided_slice %133 {offsets = [0, 256], sizes = [8, 128], strides = [1, 1]} : vector<8x384xf32> to vector<8x128xf32>
    %139 = arith.mulf %137, %118 : vector<8x128xf32>
    %140 = arith.mulf %136, %135 : vector<8x128xf32>
    %141 = arith.addf %139, %140 : vector<8x128xf32>
    %142 = math.tanh %141 : vector<8x128xf32>
    %143 = arith.mulf %138, %142 : vector<8x128xf32>
    %c6_i32 = arith.constant 6 : i32
    %144 = arith.index_cast %c6_i32 : i32 to index
    %c0_30 = arith.constant 0 : index
    %c0_31 = arith.constant 0 : index
    %145 = vector.load %arg2[%144, %c0_30, %c0_31] : memref<8x8x512xbf16, #tpu.memory_space<vmem>>, vector<1x8x512xbf16>
    %146 = vector.shape_cast %145 : vector<1x8x512xbf16> to vector<8x512xbf16>
    %147 = arith.extf %146 : vector<8x512xbf16> to vector<8x512xf32>
    %148 = arith.truncf %143 : vector<8x128xf32> to vector<8x128xbf16>
    %cst_32 = arith.constant dense<0.000000e+00> : vector<8x512xf32>
    %149 = tpu.matmul %148, %3, %cst_32 {dimension_numbers = #tpu.dot_dimension_numbers<[1], [0], [0], [1], [0, 0, 1, 1], [], []>} : vector<8x128xbf16>, vector<128x512xbf16>, vector<8x512xf32> -> vector<8x512xf32>
    %150 = arith.addf %147, %149 : vector<8x512xf32>
    %151 = vector.extract_strided_slice %150 {offsets = [0, 0], sizes = [8, 384], strides = [1, 1]} : vector<8x512xf32> to vector<8x384xf32>
    %152 = arith.negf %151 : vector<8x384xf32>
    %153 = math.exp %152 : vector<8x384xf32>
    %cst_33 = arith.constant 1.000000e+00 : f32
    %154 = vector.broadcast %cst_33 : f32 to vector<8x384xf32>
    %155 = arith.addf %154, %153 : vector<8x384xf32>
    %156 = arith.divf %154, %155 : vector<8x384xf32>
    %157 = vector.extract_strided_slice %150 {offsets = [0, 384], sizes = [8, 128], strides = [1, 1]} : vector<8x512xf32> to vector<8x128xf32>
    %158 = math.tanh %157 : vector<8x128xf32>
    %159 = vector.extract_strided_slice %156 {offsets = [0, 0], sizes = [8, 128], strides = [1, 1]} : vector<8x384xf32> to vector<8x128xf32>
    %160 = vector.extract_strided_slice %156 {offsets = [0, 128], sizes = [8, 128], strides = [1, 1]} : vector<8x384xf32> to vector<8x128xf32>
    %161 = vector.extract_strided_slice %156 {offsets = [0, 256], sizes = [8, 128], strides = [1, 1]} : vector<8x384xf32> to vector<8x128xf32>
    %162 = arith.mulf %160, %141 : vector<8x128xf32>
    %163 = arith.mulf %159, %158 : vector<8x128xf32>
    %164 = arith.addf %162, %163 : vector<8x128xf32>
    %165 = math.tanh %164 : vector<8x128xf32>
    %166 = arith.mulf %161, %165 : vector<8x128xf32>
    %c7_i32 = arith.constant 7 : i32
    %167 = arith.index_cast %c7_i32 : i32 to index
    %c0_34 = arith.constant 0 : index
    %c0_35 = arith.constant 0 : index
    %168 = vector.load %arg2[%167, %c0_34, %c0_35] : memref<8x8x512xbf16, #tpu.memory_space<vmem>>, vector<1x8x512xbf16>
    %169 = vector.shape_cast %168 : vector<1x8x512xbf16> to vector<8x512xbf16>
    %170 = arith.extf %169 : vector<8x512xbf16> to vector<8x512xf32>
    %171 = arith.truncf %166 : vector<8x128xf32> to vector<8x128xbf16>
    %cst_36 = arith.constant dense<0.000000e+00> : vector<8x512xf32>
    %172 = tpu.matmul %171, %3, %cst_36 {dimension_numbers = #tpu.dot_dimension_numbers<[1], [0], [0], [1], [0, 0, 1, 1], [], []>} : vector<8x128xbf16>, vector<128x512xbf16>, vector<8x512xf32> -> vector<8x512xf32>
    %173 = arith.addf %170, %172 : vector<8x512xf32>
    %174 = vector.extract_strided_slice %173 {offsets = [0, 0], sizes = [8, 384], strides = [1, 1]} : vector<8x512xf32> to vector<8x384xf32>
    %175 = arith.negf %174 : vector<8x384xf32>
    %176 = math.exp %175 : vector<8x384xf32>
    %cst_37 = arith.constant 1.000000e+00 : f32
    %177 = vector.broadcast %cst_37 : f32 to vector<8x384xf32>
    %178 = arith.addf %177, %176 : vector<8x384xf32>
    %179 = arith.divf %177, %178 : vector<8x384xf32>
    %180 = vector.extract_strided_slice %173 {offsets = [0, 384], sizes = [8, 128], strides = [1, 1]} : vector<8x512xf32> to vector<8x128xf32>
    %181 = math.tanh %180 : vector<8x128xf32>
    %182 = vector.extract_strided_slice %179 {offsets = [0, 0], sizes = [8, 128], strides = [1, 1]} : vector<8x384xf32> to vector<8x128xf32>
    %183 = vector.extract_strided_slice %179 {offsets = [0, 128], sizes = [8, 128], strides = [1, 1]} : vector<8x384xf32> to vector<8x128xf32>
    %184 = vector.extract_strided_slice %179 {offsets = [0, 256], sizes = [8, 128], strides = [1, 1]} : vector<8x384xf32> to vector<8x128xf32>
    %185 = arith.mulf %183, %164 : vector<8x128xf32>
    %186 = arith.mulf %182, %181 : vector<8x128xf32>
    %187 = arith.addf %185, %186 : vector<8x128xf32>
    %188 = math.tanh %187 : vector<8x128xf32>
    %189 = arith.mulf %184, %188 : vector<8x128xf32>
    %c8_i32 = arith.constant 8 : i32
    %c0_38 = arith.constant 0 : index
    %c0_39 = arith.constant 0 : index
    %190 = vector.load %arg6[%c0_38, %c0_39] : memref<8x128xf32, #tpu.memory_space<vmem>>, vector<8x128xf32>
    tpu.vector_store %arg6[%c0_38, %c0_39], %189 {strides = array<i32>} : memref<8x128xf32, #tpu.memory_space<vmem>>, vector<8x128xf32>,
    %c0_40 = arith.constant 0 : index
    %c0_41 = arith.constant 0 : index
    %191 = vector.load %arg7[%c0_40, %c0_41] : memref<8x128xf32, #tpu.memory_space<vmem>>, vector<8x128xf32>
    tpu.vector_store %arg7[%c0_40, %c0_41], %187 {strides = array<i32>} : memref<8x128xf32, #tpu.memory_space<vmem>>, vector<8x128xf32>,
    %c0_i32_42 = arith.constant 0 : i32
    %192 = arith.cmpi eq, %arg1, %c0_i32_42 : i32
    %193 = arith.extui %192 : i1 to i32
    %c0_i32_43 = arith.constant 0 : i32
    %194 = arith.cmpi ne, %193, %c0_i32_43 : i32
    scf.if %194 {
      %c0_44 = arith.constant 0 : index
      %c0_45 = arith.constant 0 : index
      %195 = vector.load %arg4[%c0_44, %c0_45] : memref<8x128xf32, #tpu.memory_space<vmem>>, vector<8x128xf32>
      tpu.vector_store %arg4[%c0_44, %c0_45], %189 {strides = array<i32>} : memref<8x128xf32, #tpu.memory_space<vmem>>, vector<8x128xf32>,
    } else {
    }
    return
  }
  func.func @transform_0(%arg0: i32, %arg1: i32) -> (i32, i32, i32) {
    %c0_i32 = arith.constant 0 : i32
    %c0_i32_0 = arith.constant 0 : i32
    return %arg1, %arg0, %c0_i32 : i32, i32, i32
  }
  func.func @transform_2(%arg0: i32, %arg1: i32) -> (i32, i32) {
    %c0_i32 = arith.constant 0 : i32
    %c0_i32_0 = arith.constant 0 : i32
    return %arg0, %c0_i32 : i32, i32
  }
}

</mosaic_0001>

<llo_original>
// kernel: lstm_embed_forward.1
$region0: #{lstm_embed_forward.1}
  #allocation0 [shape = 'u32[]', space=smem, size = 0x4, offset = 0x4, fixed_abs, tag = 'smem constant byte address 0x4 - core index']
  #allocation1 [shape = 'u32[72,128]{1,0:T(1,128)}', space=vmem, size = 0x9000, scoped, tag = 'internal scratch']
  #allocation2 [shape = 'bf16[128,512]{1,0:T(8,128)(2,1)}', space=vmem, size = 0x20000, scoped, tag = 'scratch operand']
  #allocation3 [shape = 'f32[8,128]{1,0:T(8,128)}', space=vmem, size = 0x1000, scoped, tag = 'scratch operand']
  #allocation4 [shape = 'f32[8,128]{1,0:T(8,128)}', space=vmem, size = 0x1000, scoped, tag = 'scratch operand']
  #allocation5 [shape = 's32[1]{0}', space=sflag, size = 0x4, scoped, tag = 'scratch operand']
  #allocation6 [shape = 's32[]', space=sflag, size = 0x4, offset = 0, fixed_abs, tag = 'sflag constant byte address 0x0 - dummy sync flag']
  %s0 = inlined_call_operand.vmem [shape: bf16[8,8,512], index: 0, kind: input, shape index: {}]
  %s1 = inlined_call_operand.vmem [shape: bf16[128,512], index: 1, kind: input, shape index: {}]
  %s2 = inlined_call_operand.vmem [shape: f32[8,128], index: 2, kind: output, shape index: {}]
  %s3 = sld [smem:[#allocation0]]
  $region41: #{lstm_embed_forward.1} parent=0
    _
  %s5 = ssub.s32 1, %s3
  %s6 = scalar_select 0, %s5, %s3
  // Predicated region
  $region2: #{lstm_embed_forward.1} parent=0 // pred_check
    _
  $region3: #{lstm_embed_forward.1} parent=0 // pred_check_branch
    %8 = sbr.rel (0) target = $region5
  $region4: #{lstm_embed_forward.1} parent=0 // pred_region
    _
  $region5: #{lstm_embed_forward.1} parent=0 // pred_fallthru
    _
  %p9 = scmp.eq.s32.totalorder 0, 0
  // Predicated region
  $region6: #{lstm_embed_forward.1} parent=0 // pred_check
    %p10 = pneg %p9
  $region7: #{lstm_embed_forward.1} parent=0 // pred_check_branch
    %12 = sbr.rel (%p10) target = $region9
  $region8: #{lstm_embed_forward.1} parent=0 // pred_region
    // Predicated region
    $region10: #{lstm_embed_forward.1} parent=8 // pred_check
      _
    $region11: #{lstm_embed_forward.1} parent=8 // pred_check_branch
      %14 = sbr.rel (0) target = $region13
    $region12: #{lstm_embed_forward.1} parent=8 // pred_region
      loop: start=0, step=1, limit=1
      $region14: #{lstm_embed_forward.1} parent=12 // loop_pre_header
        _
      $region15: #{lstm_embed_forward.1} parent=12 // loop_header
        %s16 = sphi 0, %s20
        %p17 = scmp.ge.s32.totalorder %s16, 1
        %s21 = sphi %s1, %s1
        %s22 = sphi [#allocation2], [#allocation2]
      $region16: #{lstm_embed_forward.1} parent=12 // loop_header_branch
        %19 = sbr.rel (%p17) target = $region20
      $region17: #{lstm_embed_forward.1} parent=12 // loop_body
        %v23 = vld [vmem:[%s21] sm:$0xff]
        %24 = vst [vmem:[%s22] sm:$0xff] %v23
        %v25 = vld [vmem:[%s21 + $0x8] sm:$0xff]
        %26 = vst [vmem:[%s22 + $0x8] sm:$0xff] %v25
        %v27 = vld [vmem:[%s21 + $0x10] sm:$0xff]
        %28 = vst [vmem:[%s22 + $0x10] sm:$0xff] %v27
        %v29 = vld [vmem:[%s21 + $0x18] sm:$0xff]
        %30 = vst [vmem:[%s22 + $0x18] sm:$0xff] %v29
        %v31 = vld [vmem:[%s21 + $0x20] sm:$0xff]
        %32 = vst [vmem:[%s22 + $0x20] sm:$0xff] %v31
        %v33 = vld [vmem:[%s21 + $0x28] sm:$0xff]
        %34 = vst [vmem:[%s22 + $0x28] sm:$0xff] %v33
        %v35 = vld [vmem:[%s21 + $0x30] sm:$0xff]
        %36 = vst [vmem:[%s22 + $0x30] sm:$0xff] %v35
        %v37 = vld [vmem:[%s21 + $0x38] sm:$0xff]
        %38 = vst [vmem:[%s22 + $0x38] sm:$0xff] %v37
        %v39 = vld [vmem:[%s21 + $0x40] sm:$0xff]
        %40 = vst [vmem:[%s22 + $0x40] sm:$0xff] %v39
        %v41 = vld [vmem:[%s21 + $0x48] sm:$0xff]
        %42 = vst [vmem:[%s22 + $0x48] sm:$0xff] %v41
        %v43 = vld [vmem:[%s21 + $0x50] sm:$0xff]
        %44 = vst [vmem:[%s22 + $0x50] sm:$0xff] %v43
        %v45 = vld [vmem:[%s21 + $0x58] sm:$0xff]
        %46 = vst [vmem:[%s22 + $0x58] sm:$0xff] %v45
        %v47 = vld [vmem:[%s21 + $0x60] sm:$0xff]
        %48 = vst [vmem:[%s22 + $0x60] sm:$0xff] %v47
        %v49 = vld [vmem:[%s21 + $0x68] sm:$0xff]
        %50 = vst [vmem:[%s22 + $0x68] sm:$0xff] %v49
        %v51 = vld [vmem:[%s21 + $0x70] sm:$0xff]
        %52 = vst [vmem:[%s22 + $0x70] sm:$0xff] %v51
        %v53 = vld [vmem:[%s21 + $0x78] sm:$0xff]
        %54 = vst [vmem:[%s22 + $0x78] sm:$0xff] %v53
        %v55 = vld [vmem:[%s21 + $0x80] sm:$0xff]
        %56 = vst [vmem:[%s22 + $0x80] sm:$0xff] %v55
        %v57 = vld [vmem:[%s21 + $0x88] sm:$0xff]
        %58 = vst [vmem:[%s22 + $0x88] sm:$0xff] %v57
        %v59 = vld [vmem:[%s21 + $0x90] sm:$0xff]
        %60 = vst [vmem:[%s22 + $0x90] sm:$0xff] %v59
        %v61 = vld [vmem:[%s21 + $0x98] sm:$0xff]
        %62 = vst [vmem:[%s22 + $0x98] sm:$0xff] %v61
        %v63 = vld [vmem:[%s21 + $0xa0] sm:$0xff]
        %64 = vst [vmem:[%s22 + $0xa0] sm:$0xff] %v63
        %v65 = vld [vmem:[%s21 + $0xa8] sm:$0xff]
        %66 = vst [vmem:[%s22 + $0xa8] sm:$0xff] %v65
        %v67 = vld [vmem:[%s21 + $0xb0] sm:$0xff]
        %68 = vst [vmem:[%s22 + $0xb0] sm:$0xff] %v67
        %v69 = vld [vmem:[%s21 + $0xb8] sm:$0xff]
        %70 = vst [vmem:[%s22 + $0xb8] sm:$0xff] %v69
        %v71 = vld [vmem:[%s21 + $0xc0] sm:$0xff]
        %72 = vst [vmem:[%s22 + $0xc0] sm:$0xff] %v71
        %v73 = vld [vmem:[%s21 + $0xc8] sm:$0xff]
        %74 = vst [vmem:[%s22 + $0xc8] sm:$0xff] %v73
        %v75 = vld [vmem:[%s21 + $0xd0] sm:$0xff]
        %76 = vst [vmem:[%s22 + $0xd0] sm:$0xff] %v75
        %v77 = vld [vmem:[%s21 + $0xd8] sm:$0xff]
        %78 = vst [vmem:[%s22 + $0xd8] sm:$0xff] %v77
        %v79 = vld [vmem:[%s21 + $0xe0] sm:$0xff]
        %80 = vst [vmem:[%s22 + $0xe0] sm:$0xff] %v79
        %v81 = vld [vmem:[%s21 + $0xe8] sm:$0xff]
        %82 = vst [vmem:[%s22 + $0xe8] sm:$0xff] %v81
        %v83 = vld [vmem:[%s21 + $0xf0] sm:$0xff]
        %84 = vst [vmem:[%s22 + $0xf0] sm:$0xff] %v83
        %v85 = vld [vmem:[%s21 + $0xf8] sm:$0xff]
        %86 = vst [vmem:[%s22 + $0xf8] sm:$0xff] %v85
      $region18: #{lstm_embed_forward.1} parent=12 // loop_footer
        %s20 = sadd.s32 1, %s16
      $region19: #{lstm_embed_forward.1} parent=12 // loop_footer_branch
        %15 = sbr.rel target = $region15
      $region20: #{lstm_embed_forward.1} parent=12 // loop_exit
        _
    $region13: #{lstm_embed_forward.1} parent=8 // pred_fallthru
      _
    // Predicated region
    $region21: #{lstm_embed_forward.1} parent=8 // pred_check
      _
    $region22: #{lstm_embed_forward.1} parent=8 // pred_check_branch
      %88 = sbr.rel target = $region24
    $region23: #{lstm_embed_forward.1} parent=8 // pred_region
      _
    $region24: #{lstm_embed_forward.1} parent=8 // pred_fallthru
      _
    // Predicated region
    $region25: #{lstm_embed_forward.1} parent=8 // pred_check
      _
    $region26: #{lstm_embed_forward.1} parent=8 // pred_check_branch
      %91 = sbr.rel (0) target = $region28
    $region27: #{lstm_embed_forward.1} parent=8 // pred_region
      %92 = vsyncadd [#allocation5], 4096
    $region28: #{lstm_embed_forward.1} parent=8 // pred_fallthru
      _
    %93 = vst [vmem:[#allocation3] sm:$0xff] 0.0
    %94 = vst [vmem:[#allocation4] sm:$0xff] 0.0
    %s95 = smul.u32 4, 16
    %s96 = smul.u32 %s95, 4
    %s97 = sshll.u32 %s96, 4
    %98 = dma.done [#allocation5], %s97
  $region9: #{lstm_embed_forward.1} parent=0 // pred_fallthru
    _
  %v99 = vld [vmem:[#allocation2] sm:$0xff]
  %v100 = vld [vmem:[#allocation2 + $0x8] sm:$0xff]
  %v101 = vld [vmem:[#allocation2 + $0x10] sm:$0xff]
  %v102 = vld [vmem:[#allocation2 + $0x18] sm:$0xff]
  %v103 = vld [vmem:[#allocation2 + $0x20] sm:$0xff]
  %v104 = vld [vmem:[#allocation2 + $0x28] sm:$0xff]
  %v105 = vld [vmem:[#allocation2 + $0x30] sm:$0xff]
  %v106 = vld [vmem:[#allocation2 + $0x38] sm:$0xff]
  %v107 = vld [vmem:[#allocation2 + $0x40] sm:$0xff]
  %v108 = vld [vmem:[#allocation2 + $0x48] sm:$0xff]
  %v109 = vld [vmem:[#allocation2 + $0x50] sm:$0xff]
  %v110 = vld [vmem:[#allocation2 + $0x58] sm:$0xff]
  %v111 = vld [vmem:[#allocation2 + $0x60] sm:$0xff]
  %v112 = vld [vmem:[#allocation2 + $0x68] sm:$0xff]
  %v113 = vld [vmem:[#allocation2 + $0x70] sm:$0xff]
  %v114 = vld [vmem:[#allocation2 + $0x78] sm:$0xff]
  %v115 = vld [vmem:[#allocation2 + $0x80] sm:$0xff]
  %v116 = vld [vmem:[#allocation2 + $0x88] sm:$0xff]
  %v117 = vld [vmem:[#allocation2 + $0x90] sm:$0xff]
  %v118 = vld [vmem:[#allocation2 + $0x98] sm:$0xff]
  %v119 = vld [vmem:[#allocation2 + $0xa0] sm:$0xff]
  %v120 = vld [vmem:[#allocation2 + $0xa8] sm:$0xff]
  %v121 = vld [vmem:[#allocation2 + $0xb0] sm:$0xff]
  %v122 = vld [vmem:[#allocation2 + $0xb8] sm:$0xff]
  %v123 = vld [vmem:[#allocation2 + $0xc0] sm:$0xff]
  %v124 = vld [vmem:[#allocation2 + $0xc8] sm:$0xff]
  %v125 = vld [vmem:[#allocation2 + $0xd0] sm:$0xff]
  %v126 = vld [vmem:[#allocation2 + $0xd8] sm:$0xff]
  %v127 = vld [vmem:[#allocation2 + $0xe0] sm:$0xff]
  %v128 = vld [vmem:[#allocation2 + $0xe8] sm:$0xff]
  %v129 = vld [vmem:[#allocation2 + $0xf0] sm:$0xff]
  %v130 = vld [vmem:[#allocation2 + $0xf8] sm:$0xff]
  %v131 = vld [vmem:[#allocation3] sm:$0xff]
  %v132 = vld [vmem:[#allocation4] sm:$0xff]
  %v133 = vld [vmem:[%s0] sm:$0xff]
  %v134 = vld [vmem:[%s0 + $0x8] sm:$0xff]
  %v135 = vunpack.c.l.bf16 %v133
  %v136 = vunpack.c.h.bf16 %v133
  %v137 = vunpack.c.l.bf16 %v134
  %v138 = vunpack.c.h.bf16 %v134
  %v139 = vpack.c.bf16 %v131, %v131
  %v172 = vunpack.c.l.b16 %v99
  %v173 = vunpack.c.h.b16 %v99
  %v174 = vunpack.c.l.b16 %v100
  %v175 = vunpack.c.h.b16 %v100
  %v176 = vunpack.c.l.b16 %v101
  %v177 = vunpack.c.h.b16 %v101
  %v178 = vunpack.c.l.b16 %v102
  %v179 = vunpack.c.h.b16 %v102
  %v180 = vunpack.c.l.b16 %v103
  %v181 = vunpack.c.h.b16 %v103
  %v182 = vunpack.c.l.b16 %v104
  %v183 = vunpack.c.h.b16 %v104
  %v184 = vunpack.c.l.b16 %v105
  %v185 = vunpack.c.h.b16 %v105
  %v186 = vunpack.c.l.b16 %v106
  %v187 = vunpack.c.h.b16 %v106
  %v188 = vunpack.c.l.b16 %v107
  %v189 = vunpack.c.h.b16 %v107
  %v190 = vunpack.c.l.b16 %v108
  %v191 = vunpack.c.h.b16 %v108
  %v192 = vunpack.c.l.b16 %v109
  %v193 = vunpack.c.h.b16 %v109
  %v194 = vunpack.c.l.b16 %v110
  %v195 = vunpack.c.h.b16 %v110
  %v196 = vunpack.c.l.b16 %v111
  %v197 = vunpack.c.h.b16 %v111
  %v198 = vunpack.c.l.b16 %v112
  %v199 = vunpack.c.h.b16 %v112
  %v200 = vunpack.c.l.b16 %v113
  %v201 = vunpack.c.h.b16 %v113
  %v202 = vunpack.c.l.b16 %v114
  %v203 = vunpack.c.h.b16 %v114
  %v204 = vunpack.c.l.b16 %v115
  %v205 = vunpack.c.h.b16 %v115
  %v206 = vunpack.c.l.b16 %v116
  %v207 = vunpack.c.h.b16 %v116
  %v208 = vunpack.c.l.b16 %v117
  %v209 = vunpack.c.h.b16 %v117
  %v210 = vunpack.c.l.b16 %v118
  %v211 = vunpack.c.h.b16 %v118
  %v212 = vunpack.c.l.b16 %v119
  %v213 = vunpack.c.h.b16 %v119
  %v214 = vunpack.c.l.b16 %v120
  %v215 = vunpack.c.h.b16 %v120
  %v216 = vunpack.c.l.b16 %v121
  %v217 = vunpack.c.h.b16 %v121
  %v218 = vunpack.c.l.b16 %v122
  %v219 = vunpack.c.h.b16 %v122
  %v220 = vunpack.c.l.b16 %v123
  %v221 = vunpack.c.h.b16 %v123
  %v222 = vunpack.c.l.b16 %v124
  %v223 = vunpack.c.h.b16 %v124
  %v224 = vunpack.c.l.b16 %v125
  %v225 = vunpack.c.h.b16 %v125
  %v226 = vunpack.c.l.b16 %v126
  %v227 = vunpack.c.h.b16 %v126
  %v228 = vunpack.c.l.b16 %v127
  %v229 = vunpack.c.h.b16 %v127
  %v230 = vunpack.c.l.b16 %v128
  %v231 = vunpack.c.h.b16 %v128
  %v232 = vunpack.c.l.b16 %v129
  %v233 = vunpack.c.h.b16 %v129
  %v234 = vunpack.c.l.b16 %v130
  %v235 = vunpack.c.h.b16 %v130
  %v236 = vpack.c.b16 %v176, %v172
  %v237 = vpack.c.b16 %v177, %v173
  %v238 = vpack.c.b16 %v178, %v174
  %v239 = vpack.c.b16 %v179, %v175
  %v240 = vpack.c.b16 %v184, %v180
  %v241 = vpack.c.b16 %v185, %v181
  %v242 = vpack.c.b16 %v186, %v182
  %v243 = vpack.c.b16 %v187, %v183
  %v244 = vpack.c.b16 %v192, %v188
  %v245 = vpack.c.b16 %v193, %v189
  %v246 = vpack.c.b16 %v194, %v190
  %v247 = vpack.c.b16 %v195, %v191
  %v248 = vpack.c.b16 %v200, %v196
  %v249 = vpack.c.b16 %v201, %v197
  %v250 = vpack.c.b16 %v202, %v198
  %v251 = vpack.c.b16 %v203, %v199
  %v252 = vpack.c.b16 %v208, %v204
  %v253 = vpack.c.b16 %v209, %v205
  %v254 = vpack.c.b16 %v210, %v206
  %v255 = vpack.c.b16 %v211, %v207
  %v256 = vpack.c.b16 %v216, %v212
  %v257 = vpack.c.b16 %v217, %v213
  %v258 = vpack.c.b16 %v218, %v214
  %v259 = vpack.c.b16 %v219, %v215
  %v260 = vpack.c.b16 %v224, %v220
  %v261 = vpack.c.b16 %v225, %v221
  %v262 = vpack.c.b16 %v226, %v222
  %v263 = vpack.c.b16 %v227, %v223
  %v264 = vpack.c.b16 %v232, %v228
  %v265 = vpack.c.b16 %v233, %v229
  %v266 = vpack.c.b16 %v234, %v230
  %v267 = vpack.c.b16 %v235, %v231
  %300 = vmatpush.bf16.msra.mxu0 %v264
  %301 = vmatpush.bf16.msra.mxu0 %v260
  %302 = vmatpush.bf16.msra.mxu0 %v256
  %303 = vmatpush.bf16.msra.mxu0 %v252
  %304 = vmatpush.bf16.msra.mxu0 %v248
  %305 = vmatpush.bf16.msra.mxu0 %v244
  %306 = vmatpush.bf16.msra.mxu0 %v240
  %307 = vmatpush.bf16.msra.mxu0 %v236
  %308 = vmatmul.bf16.gmra.mxu0 %v139
  %v309 = vpop.f32.mrf.mxu0
  %v310 = vadd.f32 0.0, %v309
  %v311 = vpop.f32.mrf.mxu0
  %312 = vdwg.mxu0
  %313 = vmatpush.bf16.msra.mxu0 %v265
  %314 = vmatpush.bf16.msra.mxu0 %v261
  %315 = vmatpush.bf16.msra.mxu0 %v257
  %316 = vmatpush.bf16.msra.mxu0 %v253
  %317 = vmatpush.bf16.msra.mxu0 %v249
  %318 = vmatpush.bf16.msra.mxu0 %v245
  %319 = vmatpush.bf16.msra.mxu0 %v241
  %320 = vmatpush.bf16.msra.mxu0 %v237
  %321 = vmatmul.bf16.gmra.mxu0 %v139
  %v322 = vpop.f32.mrf.mxu0
  %v323 = vadd.f32 0.0, %v322
  %v324 = vpop.f32.mrf.mxu0
  %325 = vdwg.mxu0
  %326 = vmatpush.bf16.msra.mxu0 %v266
  %327 = vmatpush.bf16.msra.mxu0 %v262
  %328 = vmatpush.bf16.msra.mxu0 %v258
  %329 = vmatpush.bf16.msra.mxu0 %v254
  %330 = vmatpush.bf16.msra.mxu0 %v250
  %331 = vmatpush.bf16.msra.mxu0 %v246
  %332 = vmatpush.bf16.msra.mxu0 %v242
  %333 = vmatpush.bf16.msra.mxu0 %v238
  %334 = vmatmul.bf16.gmra.mxu0 %v139
  %v335 = vpop.f32.mrf.mxu0
  %v336 = vadd.f32 0.0, %v335
  %v337 = vpop.f32.mrf.mxu0
  %338 = vdwg.mxu0
  %339 = vmatpush.bf16.msra.mxu0 %v267
  %340 = vmatpush.bf16.msra.mxu0 %v263
  %341 = vmatpush.bf16.msra.mxu0 %v259
  %342 = vmatpush.bf16.msra.mxu0 %v255
  %343 = vmatpush.bf16.msra.mxu0 %v251
  %344 = vmatpush.bf16.msra.mxu0 %v247
  %345 = vmatpush.bf16.msra.mxu0 %v243
  %346 = vmatpush.bf16.msra.mxu0 %v239
  %347 = vmatmul.bf16.gmra.mxu0 %v139
  %v348 = vpop.f32.mrf.mxu0
  %v349 = vadd.f32 0.0, %v348
  %v350 = vpop.f32.mrf.mxu0
  %351 = vdwg.mxu0
  %v352 = vadd.f32 %v135, %v310
  %v353 = vadd.f32 %v136, %v323
  %v354 = vadd.f32 %v137, %v336
  %v355 = vadd.f32 %v138, %v349
  %v356 = vxor.u32 %v352, 2147483648
  %v357 = vxor.u32 %v353, 2147483648
  %v358 = vxor.u32 %v354, 2147483648
  %v359 = vmul.f32 %v356, 1.442695
  %v360 = vpow.pop %v359
  %v361 = vmul.f32 %v357, 1.442695
  %v362 = vpow.pop %v361
  %v363 = vmul.f32 %v358, 1.442695
  %v364 = vpow.pop %v363
  %v365 = vadd.f32 %v360, 1.0
  %v366 = vadd.f32 %v362, 1.0
  %v367 = vadd.f32 %v364, 1.0
  %v368 = vrcp.pop %v365
  %v369 = vmul.f32 %v365, %v368
  %v370 = vsub.f32 1.0, %v369
  %v371 = vmul.f32 %v368, %v370
  %v372 = vadd.f32 %v368, %v371
  %vm373 = vweird.f32 %v365
  %vm374 = vweird.f32 %v368
  %vm375 = vmor %vm373, %vm374
  %v376 = vsel %vm375, %v368, %v372
  %v377 = vand.u32 2147483647, %v365
  %vm378 = vcmp.eq.f32.partialorder %v377, 8.507059e+37
  %v379 = vand.u32 %v365, 2147483648
  %v380 = vor.u32 1.1754944e-38, %v379
  %v381 = vsel %vm378, %v380, %v376
  %v382 = vmul.f32 1.0, %v381
  %v383 = vrcp.pop %v366
  %v384 = vmul.f32 %v366, %v383
  %v385 = vsub.f32 1.0, %v384
  %v386 = vmul.f32 %v383, %v385
  %v387 = vadd.f32 %v383, %v386
  %vm388 = vweird.f32 %v366
  %vm389 = vweird.f32 %v383
  %vm390 = vmor %vm388, %vm389
  %v391 = vsel %vm390, %v383, %v387
  %v392 = vand.u32 2147483647, %v366
  %vm393 = vcmp.eq.f32.partialorder %v392, 8.507059e+37
  %v394 = vand.u32 %v366, 2147483648
  %v395 = vor.u32 1.1754944e-38, %v394
  %v396 = vsel %vm393, %v395, %v391
  %v397 = vmul.f32 1.0, %v396
  %v398 = vrcp.pop %v367
  %v399 = vmul.f32 %v367, %v398
  %v400 = vsub.f32 1.0, %v399
  %v401 = vmul.f32 %v398, %v400
  %v402 = vadd.f32 %v398, %v401
  %vm403 = vweird.f32 %v367
  %vm404 = vweird.f32 %v398
  %vm405 = vmor %vm403, %vm404
  %v406 = vsel %vm405, %v398, %v402
  %v407 = vand.u32 2147483647, %v367
  %vm408 = vcmp.eq.f32.partialorder %v407, 8.507059e+37
  %v409 = vand.u32 %v367, 2147483648
  %v410 = vor.u32 1.1754944e-38, %v409
  %v411 = vsel %vm408, %v410, %v406
  %v412 = vmul.f32 1.0, %v411
  %v413 = vtanh.pop %v355
  %v414 = vmul.f32 %v397, %v132
  %v415 = vmul.f32 %v382, %v413
  %v416 = vadd.f32 %v414, %v415
  %v417 = vtanh.pop %v416
  %v418 = vmul.f32 %v412, %v417
  %s419 = scalar_lea.vmem %s0, 16
  %v420 = vld [vmem:[%s419] sm:$0xff]
  %v421 = vld [vmem:[%s419 + $0x8] sm:$0xff]
  %v422 = vunpack.c.l.bf16 %v420
  %v423 = vunpack.c.h.bf16 %v420
  %v424 = vunpack.c.l.bf16 %v421
  %v425 = vunpack.c.h.bf16 %v421
  %v426 = vpack.c.bf16 %v418, %v418
  %427 = vmatpush.bf16.msra.mxu0 %v264
  %428 = vmatpush.bf16.msra.mxu0 %v260
  %429 = vmatpush.bf16.msra.mxu0 %v256
  %430 = vmatpush.bf16.msra.mxu0 %v252
  %431 = vmatpush.bf16.msra.mxu0 %v248
  %432 = vmatpush.bf16.msra.mxu0 %v244
  %433 = vmatpush.bf16.msra.mxu0 %v240
  %434 = vmatpush.bf16.msra.mxu0 %v236
  %435 = vmatmul.bf16.gmra.mxu0 %v426
  %v436 = vpop.f32.mrf.mxu0
  %v437 = vadd.f32 0.0, %v436
  %v438 = vpop.f32.mrf.mxu0
  %439 = vdwg.mxu0
  %440 = vmatpush.bf16.msra.mxu0 %v265
  %441 = vmatpush.bf16.msra.mxu0 %v261
  %442 = vmatpush.bf16.msra.mxu0 %v257
  %443 = vmatpush.bf16.msra.mxu0 %v253
  %444 = vmatpush.bf16.msra.mxu0 %v249
  %445 = vmatpush.bf16.msra.mxu0 %v245
  %446 = vmatpush.bf16.msra.mxu0 %v241
  %447 = vmatpush.bf16.msra.mxu0 %v237
  %448 = vmatmul.bf16.gmra.mxu0 %v426
  %v449 = vpop.f32.mrf.mxu0
  %v450 = vadd.f32 0.0, %v449
  %v451 = vpop.f32.mrf.mxu0
  %452 = vdwg.mxu0
  %453 = vmatpush.bf16.msra.mxu0 %v266
  %454 = vmatpush.bf16.msra.mxu0 %v262
  %455 = vmatpush.bf16.msra.mxu0 %v258
  %456 = vmatpush.bf16.msra.mxu0 %v254
  %457 = vmatpush.bf16.msra.mxu0 %v250
  %458 = vmatpush.bf16.msra.mxu0 %v246
  %459 = vmatpush.bf16.msra.mxu0 %v242
  %460 = vmatpush.bf16.msra.mxu0 %v238
  %461 = vmatmul.bf16.gmra.mxu0 %v426
  %v462 = vpop.f32.mrf.mxu0
  %v463 = vadd.f32 0.0, %v462
  %v464 = vpop.f32.mrf.mxu0
  %465 = vdwg.mxu0
  %466 = vmatpush.bf16.msra.mxu0 %v267
  %467 = vmatpush.bf16.msra.mxu0 %v263
  %468 = vmatpush.bf16.msra.mxu0 %v259
  %469 = vmatpush.bf16.msra.mxu0 %v255
  %470 = vmatpush.bf16.msra.mxu0 %v251
  %471 = vmatpush.bf16.msra.mxu0 %v247
  %472 = vmatpush.bf16.msra.mxu0 %v243
  %473 = vmatpush.bf16.msra.mxu0 %v239
  %474 = vmatmul.bf16.gmra.mxu0 %v426
  %v475 = vpop.f32.mrf.mxu0
  %v476 = vadd.f32 0.0, %v475
  %v477 = vpop.f32.mrf.mxu0
  %478 = vdwg.mxu0
  %v479 = vadd.f32 %v422, %v437
  %v480 = vadd.f32 %v423, %v450
  %v481 = vadd.f32 %v424, %v463
  %v482 = vadd.f32 %v425, %v476
  %v483 = vxor.u32 %v479, 2147483648
  %v484 = vxor.u32 %v480, 2147483648
  %v485 = vxor.u32 %v481, 2147483648
  %v486 = vmul.f32 %v483, 1.442695
  %v487 = vpow.pop %v486
  %v488 = vmul.f32 %v484, 1.442695
  %v489 = vpow.pop %v488
  %v490 = vmul.f32 %v485, 1.442695
  %v491 = vpow.pop %v490
  %v492 = vadd.f32 %v487, 1.0
  %v493 = vadd.f32 %v489, 1.0
  %v494 = vadd.f32 %v491, 1.0
  %v495 = vrcp.pop %v492
  %v496 = vmul.f32 %v492, %v495
  %v497 = vsub.f32 1.0, %v496
  %v498 = vmul.f32 %v495, %v497
  %v499 = vadd.f32 %v495, %v498
  %vm500 = vweird.f32 %v492
  %vm501 = vweird.f32 %v495
  %vm502 = vmor %vm500, %vm501
  %v503 = vsel %vm502, %v495, %v499
  %v504 = vand.u32 2147483647, %v492
  %vm505 = vcmp.eq.f32.partialorder %v504, 8.507059e+37
  %v506 = vand.u32 %v492, 2147483648
  %v507 = vor.u32 1.1754944e-38, %v506
  %v508 = vsel %vm505, %v507, %v503
  %v509 = vmul.f32 1.0, %v508
  %v510 = vrcp.pop %v493
  %v511 = vmul.f32 %v493, %v510
  %v512 = vsub.f32 1.0, %v511
  %v513 = vmul.f32 %v510, %v512
  %v514 = vadd.f32 %v510, %v513
  %vm515 = vweird.f32 %v493
  %vm516 = vweird.f32 %v510
  %vm517 = vmor %vm515, %vm516
  %v518 = vsel %vm517, %v510, %v514
  %v519 = vand.u32 2147483647, %v493
  %vm520 = vcmp.eq.f32.partialorder %v519, 8.507059e+37
  %v521 = vand.u32 %v493, 2147483648
  %v522 = vor.u32 1.1754944e-38, %v521
  %v523 = vsel %vm520, %v522, %v518
  %v524 = vmul.f32 1.0, %v523
  %v525 = vrcp.pop %v494
  %v526 = vmul.f32 %v494, %v525
  %v527 = vsub.f32 1.0, %v526
  %v528 = vmul.f32 %v525, %v527
  %v529 = vadd.f32 %v525, %v528
  %vm530 = vweird.f32 %v494
  %vm531 = vweird.f32 %v525
  %vm532 = vmor %vm530, %vm531
  %v533 = vsel %vm532, %v525, %v529
  %v534 = vand.u32 2147483647, %v494
  %vm535 = vcmp.eq.f32.partialorder %v534, 8.507059e+37
  %v536 = vand.u32 %v494, 2147483648
  %v537 = vor.u32 1.1754944e-38, %v536
  %v538 = vsel %vm535, %v537, %v533
  %v539 = vmul.f32 1.0, %v538
  %v540 = vtanh.pop %v482
  %v541 = vmul.f32 %v524, %v416
  %v542 = vmul.f32 %v509, %v540
  %v543 = vadd.f32 %v541, %v542
  %v544 = vtanh.pop %v543
  %v545 = vmul.f32 %v539, %v544
  %s546 = scalar_lea.vmem %s0, 32
  %v547 = vld [vmem:[%s546] sm:$0xff]
  %v548 = vld [vmem:[%s546 + $0x8] sm:$0xff]
  %v549 = vunpack.c.l.bf16 %v547
  %v550 = vunpack.c.h.bf16 %v547
  %v551 = vunpack.c.l.bf16 %v548
  %v552 = vunpack.c.h.bf16 %v548
  %v553 = vpack.c.bf16 %v545, %v545
  %554 = vmatpush.bf16.msra.mxu0 %v264
  %555 = vmatpush.bf16.msra.mxu0 %v260
  %556 = vmatpush.bf16.msra.mxu0 %v256
  %557 = vmatpush.bf16.msra.mxu0 %v252
  %558 = vmatpush.bf16.msra.mxu0 %v248
  %559 = vmatpush.bf16.msra.mxu0 %v244
  %560 = vmatpush.bf16.msra.mxu0 %v240
  %561 = vmatpush.bf16.msra.mxu0 %v236
  %562 = vmatmul.bf16.gmra.mxu0 %v553
  %v563 = vpop.f32.mrf.mxu0
  %v564 = vadd.f32 0.0, %v563
  %v565 = vpop.f32.mrf.mxu0
  %566 = vdwg.mxu0
  %567 = vmatpush.bf16.msra.mxu0 %v265
  %568 = vmatpush.bf16.msra.mxu0 %v261
  %569 = vmatpush.bf16.msra.mxu0 %v257
  %570 = vmatpush.bf16.msra.mxu0 %v253
  %571 = vmatpush.bf16.msra.mxu0 %v249
  %572 = vmatpush.bf16.msra.mxu0 %v245
  %573 = vmatpush.bf16.msra.mxu0 %v241
  %574 = vmatpush.bf16.msra.mxu0 %v237
  %575 = vmatmul.bf16.gmra.mxu0 %v553
  %v576 = vpop.f32.mrf.mxu0
  %v577 = vadd.f32 0.0, %v576
  %v578 = vpop.f32.mrf.mxu0
  %579 = vdwg.mxu0
  %580 = vmatpush.bf16.msra.mxu0 %v266
  %581 = vmatpush.bf16.msra.mxu0 %v262
  %582 = vmatpush.bf16.msra.mxu0 %v258
  %583 = vmatpush.bf16.msra.mxu0 %v254
  %584 = vmatpush.bf16.msra.mxu0 %v250
  %585 = vmatpush.bf16.msra.mxu0 %v246
  %586 = vmatpush.bf16.msra.mxu0 %v242
  %587 = vmatpush.bf16.msra.mxu0 %v238
  %588 = vmatmul.bf16.gmra.mxu0 %v553
  %v589 = vpop.f32.mrf.mxu0
  %v590 = vadd.f32 0.0, %v589
  %v591 = vpop.f32.mrf.mxu0
  %592 = vdwg.mxu0
  %593 = vmatpush.bf16.msra.mxu0 %v267
  %594 = vmatpush.bf16.msra.mxu0 %v263
  %595 = vmatpush.bf16.msra.mxu0 %v259
  %596 = vmatpush.bf16.msra.mxu0 %v255
  %597 = vmatpush.bf16.msra.mxu0 %v251
  %598 = vmatpush.bf16.msra.mxu0 %v247
  %599 = vmatpush.bf16.msra.mxu0 %v243
  %600 = vmatpush.bf16.msra.mxu0 %v239
  %601 = vmatmul.bf16.gmra.mxu0 %v553
  %v602 = vpop.f32.mrf.mxu0
  %v603 = vadd.f32 0.0, %v602
  %v604 = vpop.f32.mrf.mxu0
  %605 = vdwg.mxu0
  %v606 = vadd.f32 %v549, %v564
  %v607 = vadd.f32 %v550, %v577
  %v608 = vadd.f32 %v551, %v590
  %v609 = vadd.f32 %v552, %v603
  %v610 = vxor.u32 %v606, 2147483648
  %v611 = vxor.u32 %v607, 2147483648
  %v612 = vxor.u32 %v608, 2147483648
  %v613 = vmul.f32 %v610, 1.442695
  %v614 = vpow.pop %v613
  %v615 = vmul.f32 %v611, 1.442695
  %v616 = vpow.pop %v615
  %v617 = vmul.f32 %v612, 1.442695
  %v618 = vpow.pop %v617
  %v619 = vadd.f32 %v614, 1.0
  %v620 = vadd.f32 %v616, 1.0
  %v621 = vadd.f32 %v618, 1.0
  %v622 = vrcp.pop %v619
  %v623 = vmul.f32 %v619, %v622
  %v624 = vsub.f32 1.0, %v623
  %v625 = vmul.f32 %v622, %v624
  %v626 = vadd.f32 %v622, %v625
  %vm627 = vweird.f32 %v619
  %vm628 = vweird.f32 %v622
  %vm629 = vmor %vm627, %vm628
  %v630 = vsel %vm629, %v622, %v626
  %v631 = vand.u32 2147483647, %v619
  %vm632 = vcmp.eq.f32.partialorder %v631, 8.507059e+37
  %v633 = vand.u32 %v619, 2147483648
  %v634 = vor.u32 1.1754944e-38, %v633
  %v635 = vsel %vm632, %v634, %v630
  %v636 = vmul.f32 1.0, %v635
  %v637 = vrcp.pop %v620
  %v638 = vmul.f32 %v620, %v637
  %v639 = vsub.f32 1.0, %v638
  %v640 = vmul.f32 %v637, %v639
  %v641 = vadd.f32 %v637, %v640
  %vm642 = vweird.f32 %v620
  %vm643 = vweird.f32 %v637
  %vm644 = vmor %vm642, %vm643
  %v645 = vsel %vm644, %v637, %v641
  %v646 = vand.u32 2147483647, %v620
  %vm647 = vcmp.eq.f32.partialorder %v646, 8.507059e+37
  %v648 = vand.u32 %v620, 2147483648
  %v649 = vor.u32 1.1754944e-38, %v648
  %v650 = vsel %vm647, %v649, %v645
  %v651 = vmul.f32 1.0, %v650
  %v652 = vrcp.pop %v621
  %v653 = vmul.f32 %v621, %v652
  %v654 = vsub.f32 1.0, %v653
  %v655 = vmul.f32 %v652, %v654
  %v656 = vadd.f32 %v652, %v655
  %vm657 = vweird.f32 %v621
  %vm658 = vweird.f32 %v652
  %vm659 = vmor %vm657, %vm658
  %v660 = vsel %vm659, %v652, %v656
  %v661 = vand.u32 2147483647, %v621
  %vm662 = vcmp.eq.f32.partialorder %v661, 8.507059e+37
  %v663 = vand.u32 %v621, 2147483648
  %v664 = vor.u32 1.1754944e-38, %v663
  %v665 = vsel %vm662, %v664, %v660
  %v666 = vmul.f32 1.0, %v665
  %v667 = vtanh.pop %v609
  %v668 = vmul.f32 %v651, %v543
  %v669 = vmul.f32 %v636, %v667
  %v670 = vadd.f32 %v668, %v669
  %v671 = vtanh.pop %v670
  %v672 = vmul.f32 %v666, %v671
  %s673 = scalar_lea.vmem %s0, 48
  %v674 = vld [vmem:[%s673] sm:$0xff]
  %v675 = vld [vmem:[%s673 + $0x8] sm:$0xff]
  %v676 = vunpack.c.l.bf16 %v674
  %v677 = vunpack.c.h.bf16 %v674
  %v678 = vunpack.c.l.bf16 %v675
  %v679 = vunpack.c.h.bf16 %v675
  %v680 = vpack.c.bf16 %v672, %v672
  %681 = vmatpush.bf16.msra.mxu0 %v264
  %682 = vmatpush.bf16.msra.mxu0 %v260
  %683 = vmatpush.bf16.msra.mxu0 %v256
  %684 = vmatpush.bf16.msra.mxu0 %v252
  %685 = vmatpush.bf16.msra.mxu0 %v248
  %686 = vmatpush.bf16.msra.mxu0 %v244
  %687 = vmatpush.bf16.msra.mxu0 %v240
  %688 = vmatpush.bf16.msra.mxu0 %v236
  %689 = vmatmul.bf16.gmra.mxu0 %v680
  %v690 = vpop.f32.mrf.mxu0
  %v691 = vadd.f32 0.0, %v690
  %v692 = vpop.f32.mrf.mxu0
  %693 = vdwg.mxu0
  %694 = vmatpush.bf16.msra.mxu0 %v265
  %695 = vmatpush.bf16.msra.mxu0 %v261
  %696 = vmatpush.bf16.msra.mxu0 %v257
  %697 = vmatpush.bf16.msra.mxu0 %v253
  %698 = vmatpush.bf16.msra.mxu0 %v249
  %699 = vmatpush.bf16.msra.mxu0 %v245
  %700 = vmatpush.bf16.msra.mxu0 %v241
  %701 = vmatpush.bf16.msra.mxu0 %v237
  %702 = vmatmul.bf16.gmra.mxu0 %v680
  %v703 = vpop.f32.mrf.mxu0
  %v704 = vadd.f32 0.0, %v703
  %v705 = vpop.f32.mrf.mxu0
  %706 = vdwg.mxu0
  %707 = vmatpush.bf16.msra.mxu0 %v266
  %708 = vmatpush.bf16.msra.mxu0 %v262
  %709 = vmatpush.bf16.msra.mxu0 %v258
  %710 = vmatpush.bf16.msra.mxu0 %v254
  %711 = vmatpush.bf16.msra.mxu0 %v250
  %712 = vmatpush.bf16.msra.mxu0 %v246
  %713 = vmatpush.bf16.msra.mxu0 %v242
  %714 = vmatpush.bf16.msra.mxu0 %v238
  %715 = vmatmul.bf16.gmra.mxu0 %v680
  %v716 = vpop.f32.mrf.mxu0
  %v717 = vadd.f32 0.0, %v716
  %v718 = vpop.f32.mrf.mxu0
  %719 = vdwg.mxu0
  %720 = vmatpush.bf16.msra.mxu0 %v267
  %721 = vmatpush.bf16.msra.mxu0 %v263
  %722 = vmatpush.bf16.msra.mxu0 %v259
  %723 = vmatpush.bf16.msra.mxu0 %v255
  %724 = vmatpush.bf16.msra.mxu0 %v251
  %725 = vmatpush.bf16.msra.mxu0 %v247
  %726 = vmatpush.bf16.msra.mxu0 %v243
  %727 = vmatpush.bf16.msra.mxu0 %v239
  %728 = vmatmul.bf16.gmra.mxu0 %v680
  %v729 = vpop.f32.mrf.mxu0
  %v730 = vadd.f32 0.0, %v729
  %v731 = vpop.f32.mrf.mxu0
  %732 = vdwg.mxu0
  %v733 = vadd.f32 %v676, %v691
  %v734 = vadd.f32 %v677, %v704
  %v735 = vadd.f32 %v678, %v717
  %v736 = vadd.f32 %v679, %v730
  %v737 = vxor.u32 %v733, 2147483648
  %v738 = vxor.u32 %v734, 2147483648
  %v739 = vxor.u32 %v735, 2147483648
  %v740 = vmul.f32 %v737, 1.442695
  %v741 = vpow.pop %v740
  %v742 = vmul.f32 %v738, 1.442695
  %v743 = vpow.pop %v742
  %v744 = vmul.f32 %v739, 1.442695
  %v745 = vpow.pop %v744
  %v746 = vadd.f32 %v741, 1.0
  %v747 = vadd.f32 %v743, 1.0
  %v748 = vadd.f32 %v745, 1.0
  %v749 = vrcp.pop %v746
  %v750 = vmul.f32 %v746, %v749
  %v751 = vsub.f32 1.0, %v750
  %v752 = vmul.f32 %v749, %v751
  %v753 = vadd.f32 %v749, %v752
  %vm754 = vweird.f32 %v746
  %vm755 = vweird.f32 %v749
  %vm756 = vmor %vm754, %vm755
  %v757 = vsel %vm756, %v749, %v753
  %v758 = vand.u32 2147483647, %v746
  %vm759 = vcmp.eq.f32.partialorder %v758, 8.507059e+37
  %v760 = vand.u32 %v746, 2147483648
  %v761 = vor.u32 1.1754944e-38, %v760
  %v762 = vsel %vm759, %v761, %v757
  %v763 = vmul.f32 1.0, %v762
  %v764 = vrcp.pop %v747
  %v765 = vmul.f32 %v747, %v764
  %v766 = vsub.f32 1.0, %v765
  %v767 = vmul.f32 %v764, %v766
  %v768 = vadd.f32 %v764, %v767
  %vm769 = vweird.f32 %v747
  %vm770 = vweird.f32 %v764
  %vm771 = vmor %vm769, %vm770
  %v772 = vsel %vm771, %v764, %v768
  %v773 = vand.u32 2147483647, %v747
  %vm774 = vcmp.eq.f32.partialorder %v773, 8.507059e+37
  %v775 = vand.u32 %v747, 2147483648
  %v776 = vor.u32 1.1754944e-38, %v775
  %v777 = vsel %vm774, %v776, %v772
  %v778 = vmul.f32 1.0, %v777
  %v779 = vrcp.pop %v748
  %v780 = vmul.f32 %v748, %v779
  %v781 = vsub.f32 1.0, %v780
  %v782 = vmul.f32 %v779, %v781
  %v783 = vadd.f32 %v779, %v782
  %vm784 = vweird.f32 %v748
  %vm785 = vweird.f32 %v779
  %vm786 = vmor %vm784, %vm785
  %v787 = vsel %vm786, %v779, %v783
  %v788 = vand.u32 2147483647, %v748
  %vm789 = vcmp.eq.f32.partialorder %v788, 8.507059e+37
  %v790 = vand.u32 %v748, 2147483648
  %v791 = vor.u32 1.1754944e-38, %v790
  %v792 = vsel %vm789, %v791, %v787
  %v793 = vmul.f32 1.0, %v792
  %v794 = vtanh.pop %v736
  %v795 = vmul.f32 %v778, %v670
  %v796 = vmul.f32 %v763, %v794
  %v797 = vadd.f32 %v795, %v796
  %v798 = vtanh.pop %v797
  %v799 = vmul.f32 %v793, %v798
  %s800 = scalar_lea.vmem %s0, 64
  %v801 = vld [vmem:[%s800] sm:$0xff]
  %v802 = vld [vmem:[%s800 + $0x8] sm:$0xff]
  %v803 = vunpack.c.l.bf16 %v801
  %v804 = vunpack.c.h.bf16 %v801
  %v805 = vunpack.c.l.bf16 %v802
  %v806 = vunpack.c.h.bf16 %v802
  %v807 = vpack.c.bf16 %v799, %v799
  %808 = vmatpush.bf16.msra.mxu0 %v264
  %809 = vmatpush.bf16.msra.mxu0 %v260
  %810 = vmatpush.bf16.msra.mxu0 %v256
  %811 = vmatpush.bf16.msra.mxu0 %v252
  %812 = vmatpush.bf16.msra.mxu0 %v248
  %813 = vmatpush.bf16.msra.mxu0 %v244
  %814 = vmatpush.bf16.msra.mxu0 %v240
  %815 = vmatpush.bf16.msra.mxu0 %v236
  %816 = vmatmul.bf16.gmra.mxu0 %v807
  %v817 = vpop.f32.mrf.mxu0
  %v818 = vadd.f32 0.0, %v817
  %v819 = vpop.f32.mrf.mxu0
  %820 = vdwg.mxu0
  %821 = vmatpush.bf16.msra.mxu0 %v265
  %822 = vmatpush.bf16.msra.mxu0 %v261
  %823 = vmatpush.bf16.msra.mxu0 %v257
  %824 = vmatpush.bf16.msra.mxu0 %v253
  %825 = vmatpush.bf16.msra.mxu0 %v249
  %826 = vmatpush.bf16.msra.mxu0 %v245
  %827 = vmatpush.bf16.msra.mxu0 %v241
  %828 = vmatpush.bf16.msra.mxu0 %v237
  %829 = vmatmul.bf16.gmra.mxu0 %v807
  %v830 = vpop.f32.mrf.mxu0
  %v831 = vadd.f32 0.0, %v830
  %v832 = vpop.f32.mrf.mxu0
  %833 = vdwg.mxu0
  %834 = vmatpush.bf16.msra.mxu0 %v266
  %835 = vmatpush.bf16.msra.mxu0 %v262
  %836 = vmatpush.bf16.msra.mxu0 %v258
  %837 = vmatpush.bf16.msra.mxu0 %v254
  %838 = vmatpush.bf16.msra.mxu0 %v250
  %839 = vmatpush.bf16.msra.mxu0 %v246
  %840 = vmatpush.bf16.msra.mxu0 %v242
  %841 = vmatpush.bf16.msra.mxu0 %v238
  %842 = vmatmul.bf16.gmra.mxu0 %v807
  %v843 = vpop.f32.mrf.mxu0
  %v844 = vadd.f32 0.0, %v843
  %v845 = vpop.f32.mrf.mxu0
  %846 = vdwg.mxu0
  %847 = vmatpush.bf16.msra.mxu0 %v267
  %848 = vmatpush.bf16.msra.mxu0 %v263
  %849 = vmatpush.bf16.msra.mxu0 %v259
  %850 = vmatpush.bf16.msra.mxu0 %v255
  %851 = vmatpush.bf16.msra.mxu0 %v251
  %852 = vmatpush.bf16.msra.mxu0 %v247
  %853 = vmatpush.bf16.msra.mxu0 %v243
  %854 = vmatpush.bf16.msra.mxu0 %v239
  %855 = vmatmul.bf16.gmra.mxu0 %v807
  %v856 = vpop.f32.mrf.mxu0
  %v857 = vadd.f32 0.0, %v856
  %v858 = vpop.f32.mrf.mxu0
  %859 = vdwg.mxu0
  %v860 = vadd.f32 %v803, %v818
  %v861 = vadd.f32 %v804, %v831
  %v862 = vadd.f32 %v805, %v844
  %v863 = vadd.f32 %v806, %v857
  %v864 = vxor.u32 %v860, 2147483648
  %v865 = vxor.u32 %v861, 2147483648
  %v866 = vxor.u32 %v862, 2147483648
  %v867 = vmul.f32 %v864, 1.442695
  %v868 = vpow.pop %v867
  %v869 = vmul.f32 %v865, 1.442695
  %v870 = vpow.pop %v869
  %v871 = vmul.f32 %v866, 1.442695
  %v872 = vpow.pop %v871
  %v873 = vadd.f32 %v868, 1.0
  %v874 = vadd.f32 %v870, 1.0
  %v875 = vadd.f32 %v872, 1.0
  %v876 = vrcp.pop %v873
  %v877 = vmul.f32 %v873, %v876
  %v878 = vsub.f32 1.0, %v877
  %v879 = vmul.f32 %v876, %v878
  %v880 = vadd.f32 %v876, %v879
  %vm881 = vweird.f32 %v873
  %vm882 = vweird.f32 %v876
  %vm883 = vmor %vm881, %vm882
  %v884 = vsel %vm883, %v876, %v880
  %v885 = vand.u32 2147483647, %v873
  %vm886 = vcmp.eq.f32.partialorder %v885, 8.507059e+37
  %v887 = vand.u32 %v873, 2147483648
  %v888 = vor.u32 1.1754944e-38, %v887
  %v889 = vsel %vm886, %v888, %v884
  %v890 = vmul.f32 1.0, %v889
  %v891 = vrcp.pop %v874
  %v892 = vmul.f32 %v874, %v891
  %v893 = vsub.f32 1.0, %v892
  %v894 = vmul.f32 %v891, %v893
  %v895 = vadd.f32 %v891, %v894
  %vm896 = vweird.f32 %v874
  %vm897 = vweird.f32 %v891
  %vm898 = vmor %vm896, %vm897
  %v899 = vsel %vm898, %v891, %v895
  %v900 = vand.u32 2147483647, %v874
  %vm901 = vcmp.eq.f32.partialorder %v900, 8.507059e+37
  %v902 = vand.u32 %v874, 2147483648
  %v903 = vor.u32 1.1754944e-38, %v902
  %v904 = vsel %vm901, %v903, %v899
  %v905 = vmul.f32 1.0, %v904
  %v906 = vrcp.pop %v875
  %v907 = vmul.f32 %v875, %v906
  %v908 = vsub.f32 1.0, %v907
  %v909 = vmul.f32 %v906, %v908
  %v910 = vadd.f32 %v906, %v909
  %vm911 = vweird.f32 %v875
  %vm912 = vweird.f32 %v906
  %vm913 = vmor %vm911, %vm912
  %v914 = vsel %vm913, %v906, %v910
  %v915 = vand.u32 2147483647, %v875
  %vm916 = vcmp.eq.f32.partialorder %v915, 8.507059e+37
  %v917 = vand.u32 %v875, 2147483648
  %v918 = vor.u32 1.1754944e-38, %v917
  %v919 = vsel %vm916, %v918, %v914
  %v920 = vmul.f32 1.0, %v919
  %v921 = vtanh.pop %v863
  %v922 = vmul.f32 %v905, %v797
  %v923 = vmul.f32 %v890, %v921
  %v924 = vadd.f32 %v922, %v923
  %v925 = vtanh.pop %v924
  %v926 = vmul.f32 %v920, %v925
  %s927 = scalar_lea.vmem %s0, 80
  %v928 = vld [vmem:[%s927] sm:$0xff]
  %v929 = vld [vmem:[%s927 + $0x8] sm:$0xff]
  %v930 = vunpack.c.l.bf16 %v928
  %v931 = vunpack.c.h.bf16 %v928
  %v932 = vunpack.c.l.bf16 %v929
  %v933 = vunpack.c.h.bf16 %v929
  %v934 = vpack.c.bf16 %v926, %v926
  %935 = vmatpush.bf16.msra.mxu0 %v264
  %936 = vmatpush.bf16.msra.mxu0 %v260
  %937 = vmatpush.bf16.msra.mxu0 %v256
  %938 = vmatpush.bf16.msra.mxu0 %v252
  %939 = vmatpush.bf16.msra.mxu0 %v248
  %940 = vmatpush.bf16.msra.mxu0 %v244
  %941 = vmatpush.bf16.msra.mxu0 %v240
  %942 = vmatpush.bf16.msra.mxu0 %v236
  %943 = vmatmul.bf16.gmra.mxu0 %v934
  %v944 = vpop.f32.mrf.mxu0
  %v945 = vadd.f32 0.0, %v944
  %v946 = vpop.f32.mrf.mxu0
  %947 = vdwg.mxu0
  %948 = vmatpush.bf16.msra.mxu0 %v265
  %949 = vmatpush.bf16.msra.mxu0 %v261
  %950 = vmatpush.bf16.msra.mxu0 %v257
  %951 = vmatpush.bf16.msra.mxu0 %v253
  %952 = vmatpush.bf16.msra.mxu0 %v249
  %953 = vmatpush.bf16.msra.mxu0 %v245
  %954 = vmatpush.bf16.msra.mxu0 %v241
  %955 = vmatpush.bf16.msra.mxu0 %v237
  %956 = vmatmul.bf16.gmra.mxu0 %v934
  %v957 = vpop.f32.mrf.mxu0
  %v958 = vadd.f32 0.0, %v957
  %v959 = vpop.f32.mrf.mxu0
  %960 = vdwg.mxu0
  %961 = vmatpush.bf16.msra.mxu0 %v266
  %962 = vmatpush.bf16.msra.mxu0 %v262
  %963 = vmatpush.bf16.msra.mxu0 %v258
  %964 = vmatpush.bf16.msra.mxu0 %v254
  %965 = vmatpush.bf16.msra.mxu0 %v250
  %966 = vmatpush.bf16.msra.mxu0 %v246
  %967 = vmatpush.bf16.msra.mxu0 %v242
  %968 = vmatpush.bf16.msra.mxu0 %v238
  %969 = vmatmul.bf16.gmra.mxu0 %v934
  %v970 = vpop.f32.mrf.mxu0
  %v971 = vadd.f32 0.0, %v970
  %v972 = vpop.f32.mrf.mxu0
  %973 = vdwg.mxu0
  %974 = vmatpush.bf16.msra.mxu0 %v267
  %975 = vmatpush.bf16.msra.mxu0 %v263
  %976 = vmatpush.bf16.msra.mxu0 %v259
  %977 = vmatpush.bf16.msra.mxu0 %v255
  %978 = vmatpush.bf16.msra.mxu0 %v251
  %979 = vmatpush.bf16.msra.mxu0 %v247
  %980 = vmatpush.bf16.msra.mxu0 %v243
  %981 = vmatpush.bf16.msra.mxu0 %v239
  %982 = vmatmul.bf16.gmra.mxu0 %v934
  %v983 = vpop.f32.mrf.mxu0
  %v984 = vadd.f32 0.0, %v983
  %v985 = vpop.f32.mrf.mxu0
  %986 = vdwg.mxu0
  %v987 = vadd.f32 %v930, %v945
  %v988 = vadd.f32 %v931, %v958
  %v989 = vadd.f32 %v932, %v971
  %v990 = vadd.f32 %v933, %v984
  %v991 = vxor.u32 %v987, 2147483648
  %v992 = vxor.u32 %v988, 2147483648
  %v993 = vxor.u32 %v989, 2147483648
  %v994 = vmul.f32 %v991, 1.442695
  %v995 = vpow.pop %v994
  %v996 = vmul.f32 %v992, 1.442695
  %v997 = vpow.pop %v996
  %v998 = vmul.f32 %v993, 1.442695
  %v999 = vpow.pop %v998
  %v1000 = vadd.f32 %v995, 1.0
  %v1001 = vadd.f32 %v997, 1.0
  %v1002 = vadd.f32 %v999, 1.0
  %v1003 = vrcp.pop %v1000
  %v1004 = vmul.f32 %v1000, %v1003
  %v1005 = vsub.f32 1.0, %v1004
  %v1006 = vmul.f32 %v1003, %v1005
  %v1007 = vadd.f32 %v1003, %v1006
  %vm1008 = vweird.f32 %v1000
  %vm1009 = vweird.f32 %v1003
  %vm1010 = vmor %vm1008, %vm1009
  %v1011 = vsel %vm1010, %v1003, %v1007
  %v1012 = vand.u32 2147483647, %v1000
  %vm1013 = vcmp.eq.f32.partialorder %v1012, 8.507059e+37
  %v1014 = vand.u32 %v1000, 2147483648
  %v1015 = vor.u32 1.1754944e-38, %v1014
  %v1016 = vsel %vm1013, %v1015, %v1011
  %v1017 = vmul.f32 1.0, %v1016
  %v1018 = vrcp.pop %v1001
  %v1019 = vmul.f32 %v1001, %v1018
  %v1020 = vsub.f32 1.0, %v1019
  %v1021 = vmul.f32 %v1018, %v1020
  %v1022 = vadd.f32 %v1018, %v1021
  %vm1023 = vweird.f32 %v1001
  %vm1024 = vweird.f32 %v1018
  %vm1025 = vmor %vm1023, %vm1024
  %v1026 = vsel %vm1025, %v1018, %v1022
  %v1027 = vand.u32 2147483647, %v1001
  %vm1028 = vcmp.eq.f32.partialorder %v1027, 8.507059e+37
  %v1029 = vand.u32 %v1001, 2147483648
  %v1030 = vor.u32 1.1754944e-38, %v1029
  %v1031 = vsel %vm1028, %v1030, %v1026
  %v1032 = vmul.f32 1.0, %v1031
  %v1033 = vrcp.pop %v1002
  %v1034 = vmul.f32 %v1002, %v1033
  %v1035 = vsub.f32 1.0, %v1034
  %v1036 = vmul.f32 %v1033, %v1035
  %v1037 = vadd.f32 %v1033, %v1036
  %vm1038 = vweird.f32 %v1002
  %vm1039 = vweird.f32 %v1033
  %vm1040 = vmor %vm1038, %vm1039
  %v1041 = vsel %vm1040, %v1033, %v1037
  %v1042 = vand.u32 2147483647, %v1002
  %vm1043 = vcmp.eq.f32.partialorder %v1042, 8.507059e+37
  %v1044 = vand.u32 %v1002, 2147483648
  %v1045 = vor.u32 1.1754944e-38, %v1044
  %v1046 = vsel %vm1043, %v1045, %v1041
  %v1047 = vmul.f32 1.0, %v1046
  %v1048 = vtanh.pop %v990
  %v1049 = vmul.f32 %v1032, %v924
  %v1050 = vmul.f32 %v1017, %v1048
  %v1051 = vadd.f32 %v1049, %v1050
  %v1052 = vtanh.pop %v1051
  %v1053 = vmul.f32 %v1047, %v1052
  %s1054 = scalar_lea.vmem %s0, 96
  %v1055 = vld [vmem:[%s1054] sm:$0xff]
  %v1056 = vld [vmem:[%s1054 + $0x8] sm:$0xff]
  %v1057 = vunpack.c.l.bf16 %v1055
  %v1058 = vunpack.c.h.bf16 %v1055
  %v1059 = vunpack.c.l.bf16 %v1056
  %v1060 = vunpack.c.h.bf16 %v1056
  %v1061 = vpack.c.bf16 %v1053, %v1053
  %1062 = vmatpush.bf16.msra.mxu0 %v264
  %1063 = vmatpush.bf16.msra.mxu0 %v260
  %1064 = vmatpush.bf16.msra.mxu0 %v256
  %1065 = vmatpush.bf16.msra.mxu0 %v252
  %1066 = vmatpush.bf16.msra.mxu0 %v248
  %1067 = vmatpush.bf16.msra.mxu0 %v244
  %1068 = vmatpush.bf16.msra.mxu0 %v240
  %1069 = vmatpush.bf16.msra.mxu0 %v236
  %1070 = vmatmul.bf16.gmra.mxu0 %v1061
  %v1071 = vpop.f32.mrf.mxu0
  %v1072 = vadd.f32 0.0, %v1071
  %v1073 = vpop.f32.mrf.mxu0
  %1074 = vdwg.mxu0
  %1075 = vmatpush.bf16.msra.mxu0 %v265
  %1076 = vmatpush.bf16.msra.mxu0 %v261
  %1077 = vmatpush.bf16.msra.mxu0 %v257
  %1078 = vmatpush.bf16.msra.mxu0 %v253
  %1079 = vmatpush.bf16.msra.mxu0 %v249
  %1080 = vmatpush.bf16.msra.mxu0 %v245
  %1081 = vmatpush.bf16.msra.mxu0 %v241
  %1082 = vmatpush.bf16.msra.mxu0 %v237
  %1083 = vmatmul.bf16.gmra.mxu0 %v1061
  %v1084 = vpop.f32.mrf.mxu0
  %v1085 = vadd.f32 0.0, %v1084
  %v1086 = vpop.f32.mrf.mxu0
  %1087 = vdwg.mxu0
  %1088 = vmatpush.bf16.msra.mxu0 %v266
  %1089 = vmatpush.bf16.msra.mxu0 %v262
  %1090 = vmatpush.bf16.msra.mxu0 %v258
  %1091 = vmatpush.bf16.msra.mxu0 %v254
  %1092 = vmatpush.bf16.msra.mxu0 %v250
  %1093 = vmatpush.bf16.msra.mxu0 %v246
  %1094 = vmatpush.bf16.msra.mxu0 %v242
  %1095 = vmatpush.bf16.msra.mxu0 %v238
  %1096 = vmatmul.bf16.gmra.mxu0 %v1061
  %v1097 = vpop.f32.mrf.mxu0
  %v1098 = vadd.f32 0.0, %v1097
  %v1099 = vpop.f32.mrf.mxu0
  %1100 = vdwg.mxu0
  %1101 = vmatpush.bf16.msra.mxu0 %v267
  %1102 = vmatpush.bf16.msra.mxu0 %v263
  %1103 = vmatpush.bf16.msra.mxu0 %v259
  %1104 = vmatpush.bf16.msra.mxu0 %v255
  %1105 = vmatpush.bf16.msra.mxu0 %v251
  %1106 = vmatpush.bf16.msra.mxu0 %v247
  %1107 = vmatpush.bf16.msra.mxu0 %v243
  %1108 = vmatpush.bf16.msra.mxu0 %v239
  %1109 = vmatmul.bf16.gmra.mxu0 %v1061
  %v1110 = vpop.f32.mrf.mxu0
  %v1111 = vadd.f32 0.0, %v1110
  %v1112 = vpop.f32.mrf.mxu0
  %1113 = vdwg.mxu0
  %v1114 = vadd.f32 %v1057, %v1072
  %v1115 = vadd.f32 %v1058, %v1085
  %v1116 = vadd.f32 %v1059, %v1098
  %v1117 = vadd.f32 %v1060, %v1111
  %v1118 = vxor.u32 %v1114, 2147483648
  %v1119 = vxor.u32 %v1115, 2147483648
  %v1120 = vxor.u32 %v1116, 2147483648
  %v1121 = vmul.f32 %v1118, 1.442695
  %v1122 = vpow.pop %v1121
  %v1123 = vmul.f32 %v1119, 1.442695
  %v1124 = vpow.pop %v1123
  %v1125 = vmul.f32 %v1120, 1.442695
  %v1126 = vpow.pop %v1125
  %v1127 = vadd.f32 %v1122, 1.0
  %v1128 = vadd.f32 %v1124, 1.0
  %v1129 = vadd.f32 %v1126, 1.0
  %v1130 = vrcp.pop %v1127
  %v1131 = vmul.f32 %v1127, %v1130
  %v1132 = vsub.f32 1.0, %v1131
  %v1133 = vmul.f32 %v1130, %v1132
  %v1134 = vadd.f32 %v1130, %v1133
  %vm1135 = vweird.f32 %v1127
  %vm1136 = vweird.f32 %v1130
  %vm1137 = vmor %vm1135, %vm1136
  %v1138 = vsel %vm1137, %v1130, %v1134
  %v1139 = vand.u32 2147483647, %v1127
  %vm1140 = vcmp.eq.f32.partialorder %v1139, 8.507059e+37
  %v1141 = vand.u32 %v1127, 2147483648
  %v1142 = vor.u32 1.1754944e-38, %v1141
  %v1143 = vsel %vm1140, %v1142, %v1138
  %v1144 = vmul.f32 1.0, %v1143
  %v1145 = vrcp.pop %v1128
  %v1146 = vmul.f32 %v1128, %v1145
  %v1147 = vsub.f32 1.0, %v1146
  %v1148 = vmul.f32 %v1145, %v1147
  %v1149 = vadd.f32 %v1145, %v1148
  %vm1150 = vweird.f32 %v1128
  %vm1151 = vweird.f32 %v1145
  %vm1152 = vmor %vm1150, %vm1151
  %v1153 = vsel %vm1152, %v1145, %v1149
  %v1154 = vand.u32 2147483647, %v1128
  %vm1155 = vcmp.eq.f32.partialorder %v1154, 8.507059e+37
  %v1156 = vand.u32 %v1128, 2147483648
  %v1157 = vor.u32 1.1754944e-38, %v1156
  %v1158 = vsel %vm1155, %v1157, %v1153
  %v1159 = vmul.f32 1.0, %v1158
  %v1160 = vrcp.pop %v1129
  %v1161 = vmul.f32 %v1129, %v1160
  %v1162 = vsub.f32 1.0, %v1161
  %v1163 = vmul.f32 %v1160, %v1162
  %v1164 = vadd.f32 %v1160, %v1163
  %vm1165 = vweird.f32 %v1129
  %vm1166 = vweird.f32 %v1160
  %vm1167 = vmor %vm1165, %vm1166
  %v1168 = vsel %vm1167, %v1160, %v1164
  %v1169 = vand.u32 2147483647, %v1129
  %vm1170 = vcmp.eq.f32.partialorder %v1169, 8.507059e+37
  %v1171 = vand.u32 %v1129, 2147483648
  %v1172 = vor.u32 1.1754944e-38, %v1171
  %v1173 = vsel %vm1170, %v1172, %v1168
  %v1174 = vmul.f32 1.0, %v1173
  %v1175 = vtanh.pop %v1117
  %v1176 = vmul.f32 %v1159, %v1051
  %v1177 = vmul.f32 %v1144, %v1175
  %v1178 = vadd.f32 %v1176, %v1177
  %v1179 = vtanh.pop %v1178
  %v1180 = vmul.f32 %v1174, %v1179
  %s1181 = scalar_lea.vmem %s0, 112
  %v1182 = vld [vmem:[%s1181] sm:$0xff]
  %v1183 = vld [vmem:[%s1181 + $0x8] sm:$0xff]
  %v1184 = vunpack.c.l.bf16 %v1182
  %v1185 = vunpack.c.h.bf16 %v1182
  %v1186 = vunpack.c.l.bf16 %v1183
  %v1187 = vunpack.c.h.bf16 %v1183
  %v1188 = vpack.c.bf16 %v1180, %v1180
  %1189 = vmatpush.bf16.msra.mxu0 %v264
  %1190 = vmatpush.bf16.msra.mxu0 %v260
  %1191 = vmatpush.bf16.msra.mxu0 %v256
  %1192 = vmatpush.bf16.msra.mxu0 %v252
  %1193 = vmatpush.bf16.msra.mxu0 %v248
  %1194 = vmatpush.bf16.msra.mxu0 %v244
  %1195 = vmatpush.bf16.msra.mxu0 %v240
  %1196 = vmatpush.bf16.msra.mxu0 %v236
  %1197 = vmatmul.bf16.gmra.mxu0 %v1188
  %v1198 = vpop.f32.mrf.mxu0
  %v1199 = vadd.f32 0.0, %v1198
  %v1200 = vpop.f32.mrf.mxu0
  %1201 = vdwg.mxu0
  %1202 = vmatpush.bf16.msra.mxu0 %v265
  %1203 = vmatpush.bf16.msra.mxu0 %v261
  %1204 = vmatpush.bf16.msra.mxu0 %v257
  %1205 = vmatpush.bf16.msra.mxu0 %v253
  %1206 = vmatpush.bf16.msra.mxu0 %v249
  %1207 = vmatpush.bf16.msra.mxu0 %v245
  %1208 = vmatpush.bf16.msra.mxu0 %v241
  %1209 = vmatpush.bf16.msra.mxu0 %v237
  %1210 = vmatmul.bf16.gmra.mxu0 %v1188
  %v1211 = vpop.f32.mrf.mxu0
  %v1212 = vadd.f32 0.0, %v1211
  %v1213 = vpop.f32.mrf.mxu0
  %1214 = vdwg.mxu0
  %1215 = vmatpush.bf16.msra.mxu0 %v266
  %1216 = vmatpush.bf16.msra.mxu0 %v262
  %1217 = vmatpush.bf16.msra.mxu0 %v258
  %1218 = vmatpush.bf16.msra.mxu0 %v254
  %1219 = vmatpush.bf16.msra.mxu0 %v250
  %1220 = vmatpush.bf16.msra.mxu0 %v246
  %1221 = vmatpush.bf16.msra.mxu0 %v242
  %1222 = vmatpush.bf16.msra.mxu0 %v238
  %1223 = vmatmul.bf16.gmra.mxu0 %v1188
  %v1224 = vpop.f32.mrf.mxu0
  %v1225 = vadd.f32 0.0, %v1224
  %v1226 = vpop.f32.mrf.mxu0
  %1227 = vdwg.mxu0
  %1228 = vmatpush.bf16.msra.mxu0 %v267
  %1229 = vmatpush.bf16.msra.mxu0 %v263
  %1230 = vmatpush.bf16.msra.mxu0 %v259
  %1231 = vmatpush.bf16.msra.mxu0 %v255
  %1232 = vmatpush.bf16.msra.mxu0 %v251
  %1233 = vmatpush.bf16.msra.mxu0 %v247
  %1234 = vmatpush.bf16.msra.mxu0 %v243
  %1235 = vmatpush.bf16.msra.mxu0 %v239
  %1236 = vmatmul.bf16.gmra.mxu0 %v1188
  %v1237 = vpop.f32.mrf.mxu0
  %v1238 = vadd.f32 0.0, %v1237
  %v1239 = vpop.f32.mrf.mxu0
  %1240 = vdwg.mxu0
  %v1241 = vadd.f32 %v1184, %v1199
  %v1242 = vadd.f32 %v1185, %v1212
  %v1243 = vadd.f32 %v1186, %v1225
  %v1244 = vadd.f32 %v1187, %v1238
  %v1245 = vxor.u32 %v1241, 2147483648
  %v1246 = vxor.u32 %v1242, 2147483648
  %v1247 = vxor.u32 %v1243, 2147483648
  %v1248 = vmul.f32 %v1245, 1.442695
  %v1249 = vpow.pop %v1248
  %v1250 = vmul.f32 %v1246, 1.442695
  %v1251 = vpow.pop %v1250
  %v1252 = vmul.f32 %v1247, 1.442695
  %v1253 = vpow.pop %v1252
  %v1254 = vadd.f32 %v1249, 1.0
  %v1255 = vadd.f32 %v1251, 1.0
  %v1256 = vadd.f32 %v1253, 1.0
  %v1257 = vrcp.pop %v1254
  %v1258 = vmul.f32 %v1254, %v1257
  %v1259 = vsub.f32 1.0, %v1258
  %v1260 = vmul.f32 %v1257, %v1259
  %v1261 = vadd.f32 %v1257, %v1260
  %vm1262 = vweird.f32 %v1254
  %vm1263 = vweird.f32 %v1257
  %vm1264 = vmor %vm1262, %vm1263
  %v1265 = vsel %vm1264, %v1257, %v1261
  %v1266 = vand.u32 2147483647, %v1254
  %vm1267 = vcmp.eq.f32.partialorder %v1266, 8.507059e+37
  %v1268 = vand.u32 %v1254, 2147483648
  %v1269 = vor.u32 1.1754944e-38, %v1268
  %v1270 = vsel %vm1267, %v1269, %v1265
  %v1271 = vmul.f32 1.0, %v1270
  %v1272 = vrcp.pop %v1255
  %v1273 = vmul.f32 %v1255, %v1272
  %v1274 = vsub.f32 1.0, %v1273
  %v1275 = vmul.f32 %v1272, %v1274
  %v1276 = vadd.f32 %v1272, %v1275
  %vm1277 = vweird.f32 %v1255
  %vm1278 = vweird.f32 %v1272
  %vm1279 = vmor %vm1277, %vm1278
  %v1280 = vsel %vm1279, %v1272, %v1276
  %v1281 = vand.u32 2147483647, %v1255
  %vm1282 = vcmp.eq.f32.partialorder %v1281, 8.507059e+37
  %v1283 = vand.u32 %v1255, 2147483648
  %v1284 = vor.u32 1.1754944e-38, %v1283
  %v1285 = vsel %vm1282, %v1284, %v1280
  %v1286 = vmul.f32 1.0, %v1285
  %v1287 = vrcp.pop %v1256
  %v1288 = vmul.f32 %v1256, %v1287
  %v1289 = vsub.f32 1.0, %v1288
  %v1290 = vmul.f32 %v1287, %v1289
  %v1291 = vadd.f32 %v1287, %v1290
  %vm1292 = vweird.f32 %v1256
  %vm1293 = vweird.f32 %v1287
  %vm1294 = vmor %vm1292, %vm1293
  %v1295 = vsel %vm1294, %v1287, %v1291
  %v1296 = vand.u32 2147483647, %v1256
  %vm1297 = vcmp.eq.f32.partialorder %v1296, 8.507059e+37
  %v1298 = vand.u32 %v1256, 2147483648
  %v1299 = vor.u32 1.1754944e-38, %v1298
  %v1300 = vsel %vm1297, %v1299, %v1295
  %v1301 = vmul.f32 1.0, %v1300
  %v1302 = vtanh.pop %v1244
  %v1303 = vmul.f32 %v1286, %v1178
  %v1304 = vmul.f32 %v1271, %v1302
  %v1305 = vadd.f32 %v1303, %v1304
  %v1306 = vtanh.pop %v1305
  %v1307 = vmul.f32 %v1301, %v1306
  %1308 = vst [vmem:[#allocation3] sm:$0xff] %v1307
  %1309 = vst [vmem:[#allocation4] sm:$0xff] %v1305
  // Predicated region
  $region29: #{lstm_embed_forward.1} parent=0 // pred_check
    %p1310 = pneg %p9
  $region30: #{lstm_embed_forward.1} parent=0 // pred_check_branch
    %1312 = sbr.rel (%p1310) target = $region32
  $region31: #{lstm_embed_forward.1} parent=0 // pred_region
    %1313 = vst [vmem:[%s2] sm:$0xff] %v1307
  $region32: #{lstm_embed_forward.1} parent=0 // pred_fallthru
    _
  // Predicated region
  $region33: #{lstm_embed_forward.1} parent=0 // pred_check
    _
  $region34: #{lstm_embed_forward.1} parent=0 // pred_check_branch
    %1315 = sbr.rel (0) target = $region36
  $region35: #{lstm_embed_forward.1} parent=0 // pred_region
    _
  $region36: #{lstm_embed_forward.1} parent=0 // pred_fallthru
    _
  // Predicated region
  $region37: #{lstm_embed_forward.1} parent=0 // pred_check
    _
  $region38: #{lstm_embed_forward.1} parent=0 // pred_check_branch
    %1317 = sbr.rel (0) target = $region40
  $region39: #{lstm_embed_forward.1} parent=0 // pred_region
    _
  $region40: #{lstm_embed_forward.1} parent=0 // pred_fallthru
    _
  %1318 = vsyncmov [#allocation5]
  %s1319 = vpop.sfrf %1318
  %p1320 = scmp.eq.s32.totalorder %s1319, 0
  %p1321 = pneg %p1320
  %1323 = shalt.err (%p1321)

</llo_original>
